<compile_context>
chip_gen: v7x
topology: tpu7x:2x2x1
jax: 0.10.0
libtpu: 0.0.40
codegen_flags: <defaults>
</compile_context>

<pallas_src>
import numpy as np
import jax
import jax.numpy as jnp
from jax import lax
from jax.experimental import pallas as pl
from jax.experimental.pallas import tpu as pltpu


def _bilstm_kernel(xf_ref, xb_ref, len_ref, wih_f_ref, wih_b_ref,
                   b_f_ref, b_b_ref, wblk_ref, out_ref,
                   gf_ref, gb_ref, hf_ref, cf_ref, hb_ref, cb_ref):
    """Fused BiLSTM chunk: in-kernel input projection + serial recurrence.

    xf_ref, xb_ref: (tc*Bp, F)  time-major-flattened x chunks (fwd chunks
                    arrive in increasing time order, bwd in decreasing order)
    len_ref:        (Bp, 1) int32 valid lengths
    wih_*:          (F, 4H)   input weights, gate columns [i, f, o, g]
    b_*:            (1, 4H)   combined biases, same column order
    wblk_ref:       (2H, 8H)  blockdiag(Whh_f, Whh_b), same column order
    out_ref:        (Bp, 2H)  lane-packed [h_fwd_final | h_bwd_final]
    gf/gb_ref:      (tc*Bp, 4H) VMEM scratch for chunk pre-activations
    h*/c*_ref:      (Bp, H)   VMEM state carried across grid steps
    """
    Bp, H = hf_ref.shape
    G = 4 * H
    tc = xf_ref.shape[0] // Bp

    i = pl.program_id(0)
    n = pl.num_programs(0)

    @pl.when(i == 0)
    def _init():
        z = jnp.zeros((Bp, H), jnp.float32)
        hf_ref[...] = z
        cf_ref[...] = z
        hb_ref[...] = z
        cb_ref[...] = z

    # ---- hoisted (per-chunk) input projection: one MXU GEMM per direction.
    # tanh fuses here, so x is read from HBM once and G never touches HBM.
    gf_ref[...] = (jnp.dot(jnp.tanh(xf_ref[...]), wih_f_ref[...],
                           preferred_element_type=jnp.float32)
                   + b_f_ref[...])
    gb_ref[...] = (jnp.dot(jnp.tanh(xb_ref[...]), wih_b_ref[...],
                           preferred_element_type=jnp.float32)
                   + b_b_ref[...])

    lens = len_ref[...]            # (Bp, 1) int32
    Wblk = wblk_ref[...]           # (2H, 8H)

    t0_f = i * tc                  # absolute time of row 0 of the fwd chunk
    t0_b = (n - 1 - i) * tc        # absolute time of row 0 of the bwd chunk

    def gates(pre, c):
        # Gate columns are pre-permuted to [i, f, o | g]:
        # sigmoid over a 3H slice, tanh over an H slice (halves EUP work).
        sg = jax.nn.sigmoid(pre[:, :3 * H])
        g_a = jnp.tanh(pre[:, 3 * H:])
        i_g = sg[:, :H]
        f_g = sg[:, H:2 * H]
        o_g = sg[:, 2 * H:]
        c_new = f_g * c + i_g * g_a
        return o_g * jnp.tanh(c_new), c_new

    def step(j, carry):
        h_f, c_f, h_b, c_b = carry
        jr = tc - 1 - j                           # bwd walks its chunk in reverse
        rf = pl.multiple_of(j * Bp, 8)            # 8-aligned sublane offsets
        rb = pl.multiple_of(jr * Bp, 8)

        # Block-diagonal fused recurrent matmul: one (Bp,2H)x(2H,8H) MXU pass
        # covers both directions; the two direction halves are then split at a
        # 4H (lane-aligned) boundary.
        h_cat = jnp.concatenate([h_f, h_b], axis=-1)
        pre = jnp.dot(h_cat, Wblk, preferred_element_type=jnp.float32)
        pre_f = pre[:, :G] + gf_ref[pl.ds(rf, Bp), :]
        pre_b = pre[:, G:] + gb_ref[pl.ds(rb, Bp), :]

        hf_n, cf_n = gates(pre_f, c_f)
        hb_n, cb_n = gates(pre_b, c_b)

        # pack_padded_sequence semantics: freeze state once t >= length.
        m_f = (t0_f + j) < lens
        m_b = (t0_b + jr) < lens
        return (jnp.where(m_f, hf_n, h_f), jnp.where(m_f, cf_n, c_f),
                jnp.where(m_b, hb_n, h_b), jnp.where(m_b, cb_n, c_b))

    carry0 = (hf_ref[...], cf_ref[...], hb_ref[...], cb_ref[...])
    unroll = True if tc <= 16 else 8              # partial unroll: avoid vreg spill
    h_f, c_f, h_b, c_b = lax.fori_loop(0, tc, step, carry0, unroll=unroll)

    hf_ref[...] = h_f
    cf_ref[...] = c_f
    hb_ref[...] = h_b
    cb_ref[...] = c_b

    @pl.when(i == n - 1)
    def _finalize():
        # Lane-packed output == h.permute(1,0,2).view(B, -1)
        out_ref[...] = jnp.concatenate([h_f, h_b], axis=-1)


def ser_rnn_encoder_forward(x_btf, lengths, params, *, time_chunk=64):
    """x_btf: (B, T, F) float32 (batch-first); lengths: (B,) int32."""
    B, T, F = x_btf.shape
    H = params["w_hh_f"].shape[1]
    G = 4 * H

    # ---- gate-column permutation [i,f,g,o] -> [i,f,o,g] (static) ----
    perm = np.concatenate([np.arange(0, H), np.arange(H, 2 * H),
                           np.arange(3 * H, 4 * H), np.arange(2 * H, 3 * H)])

    wih_f = params["w_ih_f"][perm].T.astype(jnp.float32)     # (F, 4H)
    wih_b = params["w_ih_b"][perm].T.astype(jnp.float32)
    whh_f = params["w_hh_f"][perm].T.astype(jnp.float32)     # (H, 4H)
    whh_b = params["w_hh_b"][perm].T.astype(jnp.float32)
    b_f = (params["b_ih_f"] + params["b_hh_f"])[perm].reshape(1, G).astype(jnp.float32)
    b_b = (params["b_ih_b"] + params["b_hh_b"])[perm].reshape(1, G).astype(jnp.float32)

    # Block-diagonal recurrent weight: [h_f|h_b] @ Wblk = [h_f@Whh_f | h_b@Whh_b]
    w_blk = jnp.zeros((2 * H, 2 * G), jnp.float32)
    w_blk = w_blk.at[:H, :G].set(whh_f).at[H:, G:].set(whh_b)

    # ---- pad batch to a sublane multiple and time to a chunk multiple ----
    Bp = ((B + 7) // 8) * 8

    # Chunk size: large by default, shrunk so double-buffered x chunks + G
    # scratch stay comfortably inside VMEM (v7x has only 64 MiB physical).
    def _chunk_bytes(tcand):
        x_bytes = 2 * 2 * tcand * Bp * F * 4      # 2 dirs x 2 pipeline buffers
        g_bytes = 2 * tcand * Bp * G * 4          # gf + gb scratch
        return x_bytes + g_bytes

    tc = max(1, min(int(time_chunk), T))
    while tc > 1 and _chunk_bytes(tc) > 16 * 1024 * 1024:
        tc //= 2
    Tp = -(-T // tc) * tc                          # ceil to chunk multiple
    n_chunks = Tp // tc

    # Zero padding is free correctness-wise: padded rows/timesteps are masked
    # out by the t < length test (padded batch rows get length 0).
    x_p = jnp.pad(x_btf.astype(jnp.float32), ((0, Bp - B), (0, Tp - T), (0, 0)))
    x_tm = jnp.transpose(x_p, (1, 0, 2)).reshape(Tp * Bp, F)   # time-major flat
    len_p = jnp.pad(lengths.astype(jnp.int32), (0, Bp - B)).reshape(Bp, 1)

    # Stream x from HBM in time chunks: fwd chunks ascending, bwd descending.
    xf_spec = pl.BlockSpec((tc * Bp, F), lambda i: (i, 0))
    xb_spec = pl.BlockSpec((tc * Bp, F), lambda i: (n_chunks - 1 - i, 0))

    def _full(shape):
        return pl.BlockSpec(shape, lambda i: (0,) * len(shape))

    out = pl.pallas_call(
        _bilstm_kernel,
        out_shape=jax.ShapeDtypeStruct((Bp, 2 * H), jnp.float32),
        grid=(n_chunks,),
        in_specs=[xf_spec, xb_spec,
                  _full((Bp, 1)),
                  _full((F, G)), _full((F, G)),
                  _full((1, G)), _full((1, G)),
                  _full((2 * H, 2 * G))],
        out_specs=pl.BlockSpec((Bp, 2 * H), lambda i: (0, 0)),
        scratch_shapes=[pltpu.VMEM((tc * Bp, G), jnp.float32),   # gf
                        pltpu.VMEM((tc * Bp, G), jnp.float32),   # gb
                        pltpu.VMEM((Bp, H), jnp.float32),        # h fwd
                        pltpu.VMEM((Bp, H), jnp.float32),        # c fwd
                        pltpu.VMEM((Bp, H), jnp.float32),        # h bwd
                        pltpu.VMEM((Bp, H), jnp.float32)],       # c bwd
        compiler_params=pltpu.CompilerParams(
            dimension_semantics=("arbitrary",),
            vmem_limit_bytes=32 * 1024 * 1024),
    )(x_tm, x_tm, len_p, wih_f, wih_b, b_f, b_b, w_blk)

    return out[:B]


def init_params(key, feat_size, h_size):
    """Deterministic LSTM parameters in native PyTorch layout ([i,f,g,o])."""
    ks = jax.random.split(key, 8)
    scale = 1.0 / jnp.sqrt(h_size)

    def u(k, shape):
        return jax.random.uniform(k, shape, jnp.float32, -scale, scale)

    return {
        "w_ih_f": u(ks[0], (4 * h_size, feat_size)),
        "w_hh_f": u(ks[1], (4 * h_size, h_size)),
        "b_ih_f": u(ks[2], (4 * h_size,)),
        "b_hh_f": u(ks[3], (4 * h_size,)),
        "w_ih_b": u(ks[4], (4 * h_size, feat_size)),
        "w_hh_b": u(ks[5], (4 * h_size, h_size)),
        "b_ih_b": u(ks[6], (4 * h_size,)),
        "b_hh_b": u(ks[7], (4 * h_size,)),
    }


def _reference_forward(x_btf, lengths, params):
    """Pure-JAX reference in standard PyTorch gate order for correctness check."""
    B, T, F = x_btf.shape
    H = params["w_hh_f"].shape[1]
    x = jnp.tanh(x_btf.astype(jnp.float32))
    lens = lengths.astype(jnp.int32).reshape(B, 1)

    def run(ts, Wi, Wh, bi, bh):
        Wi_t, Wh_t = Wi.T, Wh.T
        b = (bi + bh)[None, :]
        h = jnp.zeros((B, H), jnp.float32)
        c = jnp.zeros((B, H), jnp.float32)
        for t in ts:
            g = x[:, t, :] @ Wi_t + h @ Wh_t + b
            i_g = jax.nn.sigmoid(g[:, :H])
            f_g = jax.nn.sigmoid(g[:, H:2 * H])
            g_g = jnp.tanh(g[:, 2 * H:3 * H])
            o_g = jax.nn.sigmoid(g[:, 3 * H:])
            c_new = f_g * c + i_g * g_g
            h_new = o_g * jnp.tanh(c_new)
            m = t < lens
            h = jnp.where(m, h_new, h)
            c = jnp.where(m, c_new, c)
        return h

    h_f = run(range(T), params["w_ih_f"], params["w_hh_f"],
              params["b_ih_f"], params["b_hh_f"])
    h_b = run(range(T - 1, -1, -1), params["w_ih_b"], params["w_hh_b"],
              params["b_ih_b"], params["b_hh_b"])
    return jnp.concatenate([h_f, h_b], axis=-1)


if __name__ == "__main__":
    B, T, FEAT, H = 2, 8, 16, 32

    key = jax.random.PRNGKey(0)
    k_x, k_p = jax.random.split(key)
    x = jax.random.normal(k_x, (B, T, FEAT), jnp.float32)
    # pack_padded_sequence default requires lengths sorted descending
    lengths = jnp.array([8, 5], jnp.int32)

    params = init_params(k_p, FEAT, H)

    fwd = jax.jit(ser_rnn_encoder_forward)
    out = jax.block_until_ready(fwd(x, lengths, params))

    ref = _reference_forward(x, lengths, params)
    assert out.shape == (B, 2 * H)
    err = float(jnp.max(jnp.abs(out - ref)))
    assert jnp.allclose(out, ref, atol=1e-3, rtol=1e-3), err

    print("KERNEL_OK")
</pallas_src>

<mosaic_0001>
module attributes {stable_mosaic.version = 11 : i64} {
  func.func @_bilstm_kernel(%arg0: i32, %arg1: memref<64x16xf32, #tpu.memory_space<vmem>>, %arg2: memref<64x16xf32, #tpu.memory_space<vmem>>, %arg3: memref<8x1xi32, #tpu.memory_space<vmem>>, %arg4: memref<16x128xf32, #tpu.memory_space<vmem>>, %arg5: memref<16x128xf32, #tpu.memory_space<vmem>>, %arg6: memref<1x128xf32, #tpu.memory_space<vmem>>, %arg7: memref<1x128xf32, #tpu.memory_space<vmem>>, %arg8: memref<64x256xf32, #tpu.memory_space<vmem>>, %arg9: memref<8x64xf32, #tpu.memory_space<vmem>>, %arg10: memref<64x128xf32, #tpu.memory_space<vmem>>, %arg11: memref<64x128xf32, #tpu.memory_space<vmem>>, %arg12: memref<8x32xf32, #tpu.memory_space<vmem>>, %arg13: memref<8x32xf32, #tpu.memory_space<vmem>>, %arg14: memref<8x32xf32, #tpu.memory_space<vmem>>, %arg15: memref<8x32xf32, #tpu.memory_space<vmem>>) attributes {dimension_semantics = [#tpu.dimension_semantics<arbitrary>], iteration_bounds = array<i64: 1>, scalar_prefetch = 0 : i64, scratch_operands = 6 : i64, tpu.core_type = #tpu.core_type<tc>, window_params = [{transform_indices = @transform_0, window_bounds = array<i64: 64, 16>}, {transform_indices = @transform_1, window_bounds = array<i64: 64, 16>}, {pipeline_mode = #tpu.pipeline_mode<synchronous>, transform_indices = @transform_2, window_bounds = array<i64: 8, 1>}, {pipeline_mode = #tpu.pipeline_mode<synchronous>, transform_indices = @transform_3, window_bounds = array<i64: 16, 128>}, {pipeline_mode = #tpu.pipeline_mode<synchronous>, transform_indices = @transform_4, window_bounds = array<i64: 16, 128>}, {pipeline_mode = #tpu.pipeline_mode<synchronous>, transform_indices = @transform_5, window_bounds = array<i64: 1, 128>}, {pipeline_mode = #tpu.pipeline_mode<synchronous>, transform_indices = @transform_6, window_bounds = array<i64: 1, 128>}, {pipeline_mode = #tpu.pipeline_mode<synchronous>, transform_indices = @transform_7, window_bounds = array<i64: 64, 256>}, {pipeline_mode = #tpu.pipeline_mode<synchronous>, transform_indices = @transform_8, window_bounds = array<i64: 8, 64>}]} {
    %c0_i32 = arith.constant 0 : i32
    %0 = arith.cmpi eq, %arg0, %c0_i32 : i32
    %1 = arith.extui %0 : i1 to i32
    %c0_i32_0 = arith.constant 0 : i32
    %2 = arith.cmpi ne, %1, %c0_i32_0 : i32
    scf.if %2 {
      %cst_107 = arith.constant 0.000000e+00 : f32
      %555 = vector.broadcast %cst_107 : f32 to vector<8x32xf32>
      %c0_108 = arith.constant 0 : index
      %c0_109 = arith.constant 0 : index
      %556 = vector.load %arg12[%c0_108, %c0_109] : memref<8x32xf32, #tpu.memory_space<vmem>>, vector<8x32xf32>
      tpu.vector_store %arg12[%c0_108, %c0_109], %555 {strides = array<i32>} : memref<8x32xf32, #tpu.memory_space<vmem>>, vector<8x32xf32>,
      %c0_110 = arith.constant 0 : index
      %c0_111 = arith.constant 0 : index
      %557 = vector.load %arg13[%c0_110, %c0_111] : memref<8x32xf32, #tpu.memory_space<vmem>>, vector<8x32xf32>
      tpu.vector_store %arg13[%c0_110, %c0_111], %555 {strides = array<i32>} : memref<8x32xf32, #tpu.memory_space<vmem>>, vector<8x32xf32>,
      %c0_112 = arith.constant 0 : index
      %c0_113 = arith.constant 0 : index
      %558 = vector.load %arg14[%c0_112, %c0_113] : memref<8x32xf32, #tpu.memory_space<vmem>>, vector<8x32xf32>
      tpu.vector_store %arg14[%c0_112, %c0_113], %555 {strides = array<i32>} : memref<8x32xf32, #tpu.memory_space<vmem>>, vector<8x32xf32>,
      %c0_114 = arith.constant 0 : index
      %c0_115 = arith.constant 0 : index
      %559 = vector.load %arg15[%c0_114, %c0_115] : memref<8x32xf32, #tpu.memory_space<vmem>>, vector<8x32xf32>
      tpu.vector_store %arg15[%c0_114, %c0_115], %555 {strides = array<i32>} : memref<8x32xf32, #tpu.memory_space<vmem>>, vector<8x32xf32>,
    } else {
    }
    %c0 = arith.constant 0 : index
    %c0_1 = arith.constant 0 : index
    %3 = vector.load %arg1[%c0, %c0_1] : memref<64x16xf32, #tpu.memory_space<vmem>>, vector<64x16xf32>
    %4 = math.tanh %3 : vector<64x16xf32>
    %c0_2 = arith.constant 0 : index
    %c0_3 = arith.constant 0 : index
    %5 = vector.load %arg4[%c0_2, %c0_3] : memref<16x128xf32, #tpu.memory_space<vmem>>, vector<16x128xf32>
    %cst = arith.constant dense<0.000000e+00> : vector<64x128xf32>
    %6 = tpu.matmul %4, %5, %cst {dimension_numbers = #tpu.dot_dimension_numbers<[1], [0], [0], [1], [0, 0, 1, 1], [], []>} : vector<64x16xf32>, vector<16x128xf32>, vector<64x128xf32> -> vector<64x128xf32>
    %c0_4 = arith.constant 0 : index
    %c0_5 = arith.constant 0 : index
    %7 = vector.load %arg6[%c0_4, %c0_5] : memref<1x128xf32, #tpu.memory_space<vmem>>, vector<1x128xf32>
    %8 = vector.broadcast %7 : vector<1x128xf32> to vector<64x128xf32>
    %9 = arith.addf %6, %8 : vector<64x128xf32>
    %c0_6 = arith.constant 0 : index
    %c0_7 = arith.constant 0 : index
    %10 = vector.load %arg10[%c0_6, %c0_7] : memref<64x128xf32, #tpu.memory_space<vmem>>, vector<64x128xf32>
    tpu.vector_store %arg10[%c0_6, %c0_7], %9 {strides = array<i32>} : memref<64x128xf32, #tpu.memory_space<vmem>>, vector<64x128xf32>,
    %c0_8 = arith.constant 0 : index
    %c0_9 = arith.constant 0 : index
    %11 = vector.load %arg2[%c0_8, %c0_9] : memref<64x16xf32, #tpu.memory_space<vmem>>, vector<64x16xf32>
    %12 = math.tanh %11 : vector<64x16xf32>
    %c0_10 = arith.constant 0 : index
    %c0_11 = arith.constant 0 : index
    %13 = vector.load %arg5[%c0_10, %c0_11] : memref<16x128xf32, #tpu.memory_space<vmem>>, vector<16x128xf32>
    %cst_12 = arith.constant dense<0.000000e+00> : vector<64x128xf32>
    %14 = tpu.matmul %12, %13, %cst_12 {dimension_numbers = #tpu.dot_dimension_numbers<[1], [0], [0], [1], [0, 0, 1, 1], [], []>} : vector<64x16xf32>, vector<16x128xf32>, vector<64x128xf32> -> vector<64x128xf32>
    %c0_13 = arith.constant 0 : index
    %c0_14 = arith.constant 0 : index
    %15 = vector.load %arg7[%c0_13, %c0_14] : memref<1x128xf32, #tpu.memory_space<vmem>>, vector<1x128xf32>
    %16 = vector.broadcast %15 : vector<1x128xf32> to vector<64x128xf32>
    %17 = arith.addf %14, %16 : vector<64x128xf32>
    %c0_15 = arith.constant 0 : index
    %c0_16 = arith.constant 0 : index
    %18 = vector.load %arg11[%c0_15, %c0_16] : memref<64x128xf32, #tpu.memory_space<vmem>>, vector<64x128xf32>
    tpu.vector_store %arg11[%c0_15, %c0_16], %17 {strides = array<i32>} : memref<64x128xf32, #tpu.memory_space<vmem>>, vector<64x128xf32>,
    %c0_17 = arith.constant 0 : index
    %c0_18 = arith.constant 0 : index
    %19 = vector.load %arg3[%c0_17, %c0_18] : memref<8x1xi32, #tpu.memory_space<vmem>>, vector<8x1xi32>
    %c0_19 = arith.constant 0 : index
    %c0_20 = arith.constant 0 : index
    %20 = vector.load %arg8[%c0_19, %c0_20] : memref<64x256xf32, #tpu.memory_space<vmem>>, vector<64x256xf32>
    %c8_i32 = arith.constant 8 : i32
    %21 = arith.muli %arg0, %c8_i32 : i32
    %c0_i32_21 = arith.constant 0 : i32
    %22 = arith.subi %c0_i32_21, %arg0 : i32
    %c8_i32_22 = arith.constant 8 : i32
    %23 = arith.muli %22, %c8_i32_22 : i32
    %c0_23 = arith.constant 0 : index
    %c0_24 = arith.constant 0 : index
    %24 = vector.load %arg12[%c0_23, %c0_24] : memref<8x32xf32, #tpu.memory_space<vmem>>, vector<8x32xf32>
    %c0_25 = arith.constant 0 : index
    %c0_26 = arith.constant 0 : index
    %25 = vector.load %arg13[%c0_25, %c0_26] : memref<8x32xf32, #tpu.memory_space<vmem>>, vector<8x32xf32>
    %c0_27 = arith.constant 0 : index
    %c0_28 = arith.constant 0 : index
    %26 = vector.load %arg14[%c0_27, %c0_28] : memref<8x32xf32, #tpu.memory_space<vmem>>, vector<8x32xf32>
    %c0_29 = arith.constant 0 : index
    %c0_30 = arith.constant 0 : index
    %27 = vector.load %arg15[%c0_29, %c0_30] : memref<8x32xf32, #tpu.memory_space<vmem>>, vector<8x32xf32>
    %c0_i32_31 = arith.constant 0 : i32
    %c7_i32 = arith.constant 7 : i32
    %28 = arith.subi %c7_i32, %c0_i32_31 : i32
    %c8_i32_32 = arith.constant 8 : i32
    %29 = arith.muli %c0_i32_31, %c8_i32_32 : i32
    %30 = tpu.assume_multiple %29, 8 : i32
    %c8_i32_33 = arith.constant 8 : i32
    %31 = arith.muli %28, %c8_i32_33 : i32
    %32 = tpu.assume_multiple %31, 8 : i32
    %33 = tpu.concatenate %24, %26 in 1 : vector<8x32xf32>, vector<8x32xf32> -> vector<8x64xf32>
    %cst_34 = arith.constant dense<0.000000e+00> : vector<8x256xf32>
    %34 = tpu.matmul %33, %20, %cst_34 {dimension_numbers = #tpu.dot_dimension_numbers<[1], [0], [0], [1], [0, 0, 1, 1], [], []>} : vector<8x64xf32>, vector<64x256xf32>, vector<8x256xf32> -> vector<8x256xf32>
    %35 = vector.extract_strided_slice %34 {offsets = [0, 0], sizes = [8, 128], strides = [1, 1]} : vector<8x256xf32> to vector<8x128xf32>
    %36 = arith.index_cast %30 : i32 to index
    %c0_35 = arith.constant 0 : index
    %37 = vector.load %arg10[%36, %c0_35] : memref<64x128xf32, #tpu.memory_space<vmem>>, vector<8x128xf32>
    %38 = arith.addf %35, %37 : vector<8x128xf32>
    %39 = vector.extract_strided_slice %34 {offsets = [0, 128], sizes = [8, 128], strides = [1, 1]} : vector<8x256xf32> to vector<8x128xf32>
    %40 = arith.index_cast %32 : i32 to index
    %c0_36 = arith.constant 0 : index
    %41 = vector.load %arg11[%40, %c0_36] : memref<64x128xf32, #tpu.memory_space<vmem>>, vector<8x128xf32>
    %42 = arith.addf %39, %41 : vector<8x128xf32>
    %43 = vector.extract_strided_slice %38 {offsets = [0, 0], sizes = [8, 96], strides = [1, 1]} : vector<8x128xf32> to vector<8x96xf32>
    %44 = arith.negf %43 : vector<8x96xf32>
    %45 = math.exp %44 : vector<8x96xf32>
    %cst_37 = arith.constant 1.000000e+00 : f32
    %46 = vector.broadcast %cst_37 : f32 to vector<8x96xf32>
    %47 = arith.addf %46, %45 : vector<8x96xf32>
    %48 = arith.divf %46, %47 : vector<8x96xf32>
    %49 = vector.extract_strided_slice %38 {offsets = [0, 96], sizes = [8, 32], strides = [1, 1]} : vector<8x128xf32> to vector<8x32xf32>
    %50 = math.tanh %49 : vector<8x32xf32>
    %51 = vector.extract_strided_slice %48 {offsets = [0, 0], sizes = [8, 32], strides = [1, 1]} : vector<8x96xf32> to vector<8x32xf32>
    %52 = vector.extract_strided_slice %48 {offsets = [0, 32], sizes = [8, 32], strides = [1, 1]} : vector<8x96xf32> to vector<8x32xf32>
    %53 = vector.extract_strided_slice %48 {offsets = [0, 64], sizes = [8, 32], strides = [1, 1]} : vector<8x96xf32> to vector<8x32xf32>
    %54 = arith.mulf %52, %25 : vector<8x32xf32>
    %55 = arith.mulf %51, %50 : vector<8x32xf32>
    %56 = arith.addf %54, %55 : vector<8x32xf32>
    %57 = math.tanh %56 : vector<8x32xf32>
    %58 = arith.mulf %53, %57 : vector<8x32xf32>
    %59 = vector.extract_strided_slice %42 {offsets = [0, 0], sizes = [8, 96], strides = [1, 1]} : vector<8x128xf32> to vector<8x96xf32>
    %60 = arith.negf %59 : vector<8x96xf32>
    %61 = math.exp %60 : vector<8x96xf32>
    %cst_38 = arith.constant 1.000000e+00 : f32
    %62 = vector.broadcast %cst_38 : f32 to vector<8x96xf32>
    %63 = arith.addf %62, %61 : vector<8x96xf32>
    %64 = arith.divf %62, %63 : vector<8x96xf32>
    %65 = vector.extract_strided_slice %42 {offsets = [0, 96], sizes = [8, 32], strides = [1, 1]} : vector<8x128xf32> to vector<8x32xf32>
    %66 = math.tanh %65 : vector<8x32xf32>
    %67 = vector.extract_strided_slice %64 {offsets = [0, 0], sizes = [8, 32], strides = [1, 1]} : vector<8x96xf32> to vector<8x32xf32>
    %68 = vector.extract_strided_slice %64 {offsets = [0, 32], sizes = [8, 32], strides = [1, 1]} : vector<8x96xf32> to vector<8x32xf32>
    %69 = vector.extract_strided_slice %64 {offsets = [0, 64], sizes = [8, 32], strides = [1, 1]} : vector<8x96xf32> to vector<8x32xf32>
    %70 = arith.mulf %68, %27 : vector<8x32xf32>
    %71 = arith.mulf %67, %66 : vector<8x32xf32>
    %72 = arith.addf %70, %71 : vector<8x32xf32>
    %73 = math.tanh %72 : vector<8x32xf32>
    %74 = arith.mulf %69, %73 : vector<8x32xf32>
    %75 = arith.addi %21, %c0_i32_31 : i32
    %76 = vector.broadcast %75 : i32 to vector<8x1xi32>
    %77 = arith.cmpi slt, %76, %19 : vector<8x1xi32>
    %78 = arith.addi %23, %28 : i32
    %79 = vector.broadcast %78 : i32 to vector<8x1xi32>
    %80 = arith.cmpi slt, %79, %19 : vector<8x1xi32>
    %81 = vector.shape_cast %77 : vector<8x1xi1> to vector<8x1xi1>
    %82 = vector.broadcast %81 : vector<8x1xi1> to vector<8x32xi1>
    %83 = arith.select %82, %58, %24 : vector<8x32xi1>, vector<8x32xf32>
    %84 = vector.shape_cast %77 : vector<8x1xi1> to vector<8x1xi1>
    %85 = vector.broadcast %84 : vector<8x1xi1> to vector<8x32xi1>
    %86 = arith.select %85, %56, %25 : vector<8x32xi1>, vector<8x32xf32>
    %87 = vector.shape_cast %80 : vector<8x1xi1> to vector<8x1xi1>
    %88 = vector.broadcast %87 : vector<8x1xi1> to vector<8x32xi1>
    %89 = arith.select %88, %74, %26 : vector<8x32xi1>, vector<8x32xf32>
    %90 = vector.shape_cast %80 : vector<8x1xi1> to vector<8x1xi1>
    %91 = vector.broadcast %90 : vector<8x1xi1> to vector<8x32xi1>
    %92 = arith.select %91, %72, %27 : vector<8x32xi1>, vector<8x32xf32>
    %c1_i32 = arith.constant 1 : i32
    %c7_i32_39 = arith.constant 7 : i32
    %93 = arith.subi %c7_i32_39, %c1_i32 : i32
    %c8_i32_40 = arith.constant 8 : i32
    %94 = arith.muli %c1_i32, %c8_i32_40 : i32
    %95 = tpu.assume_multiple %94, 8 : i32
    %c8_i32_41 = arith.constant 8 : i32
    %96 = arith.muli %93, %c8_i32_41 : i32
    %97 = tpu.assume_multiple %96, 8 : i32
    %98 = tpu.concatenate %83, %89 in 1 : vector<8x32xf32>, vector<8x32xf32> -> vector<8x64xf32>
    %cst_42 = arith.constant dense<0.000000e+00> : vector<8x256xf32>
    %99 = tpu.matmul %98, %20, %cst_42 {dimension_numbers = #tpu.dot_dimension_numbers<[1], [0], [0], [1], [0, 0, 1, 1], [], []>} : vector<8x64xf32>, vector<64x256xf32>, vector<8x256xf32> -> vector<8x256xf32>
    %100 = vector.extract_strided_slice %99 {offsets = [0, 0], sizes = [8, 128], strides = [1, 1]} : vector<8x256xf32> to vector<8x128xf32>
    %101 = arith.index_cast %95 : i32 to index
    %c0_43 = arith.constant 0 : index
    %102 = vector.load %arg10[%101, %c0_43] : memref<64x128xf32, #tpu.memory_space<vmem>>, vector<8x128xf32>
    %103 = arith.addf %100, %102 : vector<8x128xf32>
    %104 = vector.extract_strided_slice %99 {offsets = [0, 128], sizes = [8, 128], strides = [1, 1]} : vector<8x256xf32> to vector<8x128xf32>
    %105 = arith.index_cast %97 : i32 to index
    %c0_44 = arith.constant 0 : index
    %106 = vector.load %arg11[%105, %c0_44] : memref<64x128xf32, #tpu.memory_space<vmem>>, vector<8x128xf32>
    %107 = arith.addf %104, %106 : vector<8x128xf32>
    %108 = vector.extract_strided_slice %103 {offsets = [0, 0], sizes = [8, 96], strides = [1, 1]} : vector<8x128xf32> to vector<8x96xf32>
    %109 = arith.negf %108 : vector<8x96xf32>
    %110 = math.exp %109 : vector<8x96xf32>
    %cst_45 = arith.constant 1.000000e+00 : f32
    %111 = vector.broadcast %cst_45 : f32 to vector<8x96xf32>
    %112 = arith.addf %111, %110 : vector<8x96xf32>
    %113 = arith.divf %111, %112 : vector<8x96xf32>
    %114 = vector.extract_strided_slice %103 {offsets = [0, 96], sizes = [8, 32], strides = [1, 1]} : vector<8x128xf32> to vector<8x32xf32>
    %115 = math.tanh %114 : vector<8x32xf32>
    %116 = vector.extract_strided_slice %113 {offsets = [0, 0], sizes = [8, 32], strides = [1, 1]} : vector<8x96xf32> to vector<8x32xf32>
    %117 = vector.extract_strided_slice %113 {offsets = [0, 32], sizes = [8, 32], strides = [1, 1]} : vector<8x96xf32> to vector<8x32xf32>
    %118 = vector.extract_strided_slice %113 {offsets = [0, 64], sizes = [8, 32], strides = [1, 1]} : vector<8x96xf32> to vector<8x32xf32>
    %119 = arith.mulf %117, %86 : vector<8x32xf32>
    %120 = arith.mulf %116, %115 : vector<8x32xf32>
    %121 = arith.addf %119, %120 : vector<8x32xf32>
    %122 = math.tanh %121 : vector<8x32xf32>
    %123 = arith.mulf %118, %122 : vector<8x32xf32>
    %124 = vector.extract_strided_slice %107 {offsets = [0, 0], sizes = [8, 96], strides = [1, 1]} : vector<8x128xf32> to vector<8x96xf32>
    %125 = arith.negf %124 : vector<8x96xf32>
    %126 = math.exp %125 : vector<8x96xf32>
    %cst_46 = arith.constant 1.000000e+00 : f32
    %127 = vector.broadcast %cst_46 : f32 to vector<8x96xf32>
    %128 = arith.addf %127, %126 : vector<8x96xf32>
    %129 = arith.divf %127, %128 : vector<8x96xf32>
    %130 = vector.extract_strided_slice %107 {offsets = [0, 96], sizes = [8, 32], strides = [1, 1]} : vector<8x128xf32> to vector<8x32xf32>
    %131 = math.tanh %130 : vector<8x32xf32>
    %132 = vector.extract_strided_slice %129 {offsets = [0, 0], sizes = [8, 32], strides = [1, 1]} : vector<8x96xf32> to vector<8x32xf32>
    %133 = vector.extract_strided_slice %129 {offsets = [0, 32], sizes = [8, 32], strides = [1, 1]} : vector<8x96xf32> to vector<8x32xf32>
    %134 = vector.extract_strided_slice %129 {offsets = [0, 64], sizes = [8, 32], strides = [1, 1]} : vector<8x96xf32> to vector<8x32xf32>
    %135 = arith.mulf %133, %92 : vector<8x32xf32>
    %136 = arith.mulf %132, %131 : vector<8x32xf32>
    %137 = arith.addf %135, %136 : vector<8x32xf32>
    %138 = math.tanh %137 : vector<8x32xf32>
    %139 = arith.mulf %134, %138 : vector<8x32xf32>
    %140 = arith.addi %21, %c1_i32 : i32
    %141 = vector.broadcast %140 : i32 to vector<8x1xi32>
    %142 = arith.cmpi slt, %141, %19 : vector<8x1xi32>
    %143 = arith.addi %23, %93 : i32
    %144 = vector.broadcast %143 : i32 to vector<8x1xi32>
    %145 = arith.cmpi slt, %144, %19 : vector<8x1xi32>
    %146 = vector.shape_cast %142 : vector<8x1xi1> to vector<8x1xi1>
    %147 = vector.broadcast %146 : vector<8x1xi1> to vector<8x32xi1>
    %148 = arith.select %147, %123, %83 : vector<8x32xi1>, vector<8x32xf32>
    %149 = vector.shape_cast %142 : vector<8x1xi1> to vector<8x1xi1>
    %150 = vector.broadcast %149 : vector<8x1xi1> to vector<8x32xi1>
    %151 = arith.select %150, %121, %86 : vector<8x32xi1>, vector<8x32xf32>
    %152 = vector.shape_cast %145 : vector<8x1xi1> to vector<8x1xi1>
    %153 = vector.broadcast %152 : vector<8x1xi1> to vector<8x32xi1>
    %154 = arith.select %153, %139, %89 : vector<8x32xi1>, vector<8x32xf32>
    %155 = vector.shape_cast %145 : vector<8x1xi1> to vector<8x1xi1>
    %156 = vector.broadcast %155 : vector<8x1xi1> to vector<8x32xi1>
    %157 = arith.select %156, %137, %92 : vector<8x32xi1>, vector<8x32xf32>
    %c2_i32 = arith.constant 2 : i32
    %c7_i32_47 = arith.constant 7 : i32
    %158 = arith.subi %c7_i32_47, %c2_i32 : i32
    %c8_i32_48 = arith.constant 8 : i32
    %159 = arith.muli %c2_i32, %c8_i32_48 : i32
    %160 = tpu.assume_multiple %159, 8 : i32
    %c8_i32_49 = arith.constant 8 : i32
    %161 = arith.muli %158, %c8_i32_49 : i32
    %162 = tpu.assume_multiple %161, 8 : i32
    %163 = tpu.concatenate %148, %154 in 1 : vector<8x32xf32>, vector<8x32xf32> -> vector<8x64xf32>
    %cst_50 = arith.constant dense<0.000000e+00> : vector<8x256xf32>
    %164 = tpu.matmul %163, %20, %cst_50 {dimension_numbers = #tpu.dot_dimension_numbers<[1], [0], [0], [1], [0, 0, 1, 1], [], []>} : vector<8x64xf32>, vector<64x256xf32>, vector<8x256xf32> -> vector<8x256xf32>
    %165 = vector.extract_strided_slice %164 {offsets = [0, 0], sizes = [8, 128], strides = [1, 1]} : vector<8x256xf32> to vector<8x128xf32>
    %166 = arith.index_cast %160 : i32 to index
    %c0_51 = arith.constant 0 : index
    %167 = vector.load %arg10[%166, %c0_51] : memref<64x128xf32, #tpu.memory_space<vmem>>, vector<8x128xf32>
    %168 = arith.addf %165, %167 : vector<8x128xf32>
    %169 = vector.extract_strided_slice %164 {offsets = [0, 128], sizes = [8, 128], strides = [1, 1]} : vector<8x256xf32> to vector<8x128xf32>
    %170 = arith.index_cast %162 : i32 to index
    %c0_52 = arith.constant 0 : index
    %171 = vector.load %arg11[%170, %c0_52] : memref<64x128xf32, #tpu.memory_space<vmem>>, vector<8x128xf32>
    %172 = arith.addf %169, %171 : vector<8x128xf32>
    %173 = vector.extract_strided_slice %168 {offsets = [0, 0], sizes = [8, 96], strides = [1, 1]} : vector<8x128xf32> to vector<8x96xf32>
    %174 = arith.negf %173 : vector<8x96xf32>
    %175 = math.exp %174 : vector<8x96xf32>
    %cst_53 = arith.constant 1.000000e+00 : f32
    %176 = vector.broadcast %cst_53 : f32 to vector<8x96xf32>
    %177 = arith.addf %176, %175 : vector<8x96xf32>
    %178 = arith.divf %176, %177 : vector<8x96xf32>
    %179 = vector.extract_strided_slice %168 {offsets = [0, 96], sizes = [8, 32], strides = [1, 1]} : vector<8x128xf32> to vector<8x32xf32>
    %180 = math.tanh %179 : vector<8x32xf32>
    %181 = vector.extract_strided_slice %178 {offsets = [0, 0], sizes = [8, 32], strides = [1, 1]} : vector<8x96xf32> to vector<8x32xf32>
    %182 = vector.extract_strided_slice %178 {offsets = [0, 32], sizes = [8, 32], strides = [1, 1]} : vector<8x96xf32> to vector<8x32xf32>
    %183 = vector.extract_strided_slice %178 {offsets = [0, 64], sizes = [8, 32], strides = [1, 1]} : vector<8x96xf32> to vector<8x32xf32>
    %184 = arith.mulf %182, %151 : vector<8x32xf32>
    %185 = arith.mulf %181, %180 : vector<8x32xf32>
    %186 = arith.addf %184, %185 : vector<8x32xf32>
    %187 = math.tanh %186 : vector<8x32xf32>
    %188 = arith.mulf %183, %187 : vector<8x32xf32>
    %189 = vector.extract_strided_slice %172 {offsets = [0, 0], sizes = [8, 96], strides = [1, 1]} : vector<8x128xf32> to vector<8x96xf32>
    %190 = arith.negf %189 : vector<8x96xf32>
    %191 = math.exp %190 : vector<8x96xf32>
    %cst_54 = arith.constant 1.000000e+00 : f32
    %192 = vector.broadcast %cst_54 : f32 to vector<8x96xf32>
    %193 = arith.addf %192, %191 : vector<8x96xf32>
    %194 = arith.divf %192, %193 : vector<8x96xf32>
    %195 = vector.extract_strided_slice %172 {offsets = [0, 96], sizes = [8, 32], strides = [1, 1]} : vector<8x128xf32> to vector<8x32xf32>
    %196 = math.tanh %195 : vector<8x32xf32>
    %197 = vector.extract_strided_slice %194 {offsets = [0, 0], sizes = [8, 32], strides = [1, 1]} : vector<8x96xf32> to vector<8x32xf32>
    %198 = vector.extract_strided_slice %194 {offsets = [0, 32], sizes = [8, 32], strides = [1, 1]} : vector<8x96xf32> to vector<8x32xf32>
    %199 = vector.extract_strided_slice %194 {offsets = [0, 64], sizes = [8, 32], strides = [1, 1]} : vector<8x96xf32> to vector<8x32xf32>
    %200 = arith.mulf %198, %157 : vector<8x32xf32>
    %201 = arith.mulf %197, %196 : vector<8x32xf32>
    %202 = arith.addf %200, %201 : vector<8x32xf32>
    %203 = math.tanh %202 : vector<8x32xf32>
    %204 = arith.mulf %199, %203 : vector<8x32xf32>
    %205 = arith.addi %21, %c2_i32 : i32
    %206 = vector.broadcast %205 : i32 to vector<8x1xi32>
    %207 = arith.cmpi slt, %206, %19 : vector<8x1xi32>
    %208 = arith.addi %23, %158 : i32
    %209 = vector.broadcast %208 : i32 to vector<8x1xi32>
    %210 = arith.cmpi slt, %209, %19 : vector<8x1xi32>
    %211 = vector.shape_cast %207 : vector<8x1xi1> to vector<8x1xi1>
    %212 = vector.broadcast %211 : vector<8x1xi1> to vector<8x32xi1>
    %213 = arith.select %212, %188, %148 : vector<8x32xi1>, vector<8x32xf32>
    %214 = vector.shape_cast %207 : vector<8x1xi1> to vector<8x1xi1>
    %215 = vector.broadcast %214 : vector<8x1xi1> to vector<8x32xi1>
    %216 = arith.select %215, %186, %151 : vector<8x32xi1>, vector<8x32xf32>
    %217 = vector.shape_cast %210 : vector<8x1xi1> to vector<8x1xi1>
    %218 = vector.broadcast %217 : vector<8x1xi1> to vector<8x32xi1>
    %219 = arith.select %218, %204, %154 : vector<8x32xi1>, vector<8x32xf32>
    %220 = vector.shape_cast %210 : vector<8x1xi1> to vector<8x1xi1>
    %221 = vector.broadcast %220 : vector<8x1xi1> to vector<8x32xi1>
    %222 = arith.select %221, %202, %157 : vector<8x32xi1>, vector<8x32xf32>
    %c3_i32 = arith.constant 3 : i32
    %c7_i32_55 = arith.constant 7 : i32
    %223 = arith.subi %c7_i32_55, %c3_i32 : i32
    %c8_i32_56 = arith.constant 8 : i32
    %224 = arith.muli %c3_i32, %c8_i32_56 : i32
    %225 = tpu.assume_multiple %224, 8 : i32
    %c8_i32_57 = arith.constant 8 : i32
    %226 = arith.muli %223, %c8_i32_57 : i32
    %227 = tpu.assume_multiple %226, 8 : i32
    %228 = tpu.concatenate %213, %219 in 1 : vector<8x32xf32>, vector<8x32xf32> -> vector<8x64xf32>
    %cst_58 = arith.constant dense<0.000000e+00> : vector<8x256xf32>
    %229 = tpu.matmul %228, %20, %cst_58 {dimension_numbers = #tpu.dot_dimension_numbers<[1], [0], [0], [1], [0, 0, 1, 1], [], []>} : vector<8x64xf32>, vector<64x256xf32>, vector<8x256xf32> -> vector<8x256xf32>
    %230 = vector.extract_strided_slice %229 {offsets = [0, 0], sizes = [8, 128], strides = [1, 1]} : vector<8x256xf32> to vector<8x128xf32>
    %231 = arith.index_cast %225 : i32 to index
    %c0_59 = arith.constant 0 : index
    %232 = vector.load %arg10[%231, %c0_59] : memref<64x128xf32, #tpu.memory_space<vmem>>, vector<8x128xf32>
    %233 = arith.addf %230, %232 : vector<8x128xf32>
    %234 = vector.extract_strided_slice %229 {offsets = [0, 128], sizes = [8, 128], strides = [1, 1]} : vector<8x256xf32> to vector<8x128xf32>
    %235 = arith.index_cast %227 : i32 to index
    %c0_60 = arith.constant 0 : index
    %236 = vector.load %arg11[%235, %c0_60] : memref<64x128xf32, #tpu.memory_space<vmem>>, vector<8x128xf32>
    %237 = arith.addf %234, %236 : vector<8x128xf32>
    %238 = vector.extract_strided_slice %233 {offsets = [0, 0], sizes = [8, 96], strides = [1, 1]} : vector<8x128xf32> to vector<8x96xf32>
    %239 = arith.negf %238 : vector<8x96xf32>
    %240 = math.exp %239 : vector<8x96xf32>
    %cst_61 = arith.constant 1.000000e+00 : f32
    %241 = vector.broadcast %cst_61 : f32 to vector<8x96xf32>
    %242 = arith.addf %241, %240 : vector<8x96xf32>
    %243 = arith.divf %241, %242 : vector<8x96xf32>
    %244 = vector.extract_strided_slice %233 {offsets = [0, 96], sizes = [8, 32], strides = [1, 1]} : vector<8x128xf32> to vector<8x32xf32>
    %245 = math.tanh %244 : vector<8x32xf32>
    %246 = vector.extract_strided_slice %243 {offsets = [0, 0], sizes = [8, 32], strides = [1, 1]} : vector<8x96xf32> to vector<8x32xf32>
    %247 = vector.extract_strided_slice %243 {offsets = [0, 32], sizes = [8, 32], strides = [1, 1]} : vector<8x96xf32> to vector<8x32xf32>
    %248 = vector.extract_strided_slice %243 {offsets = [0, 64], sizes = [8, 32], strides = [1, 1]} : vector<8x96xf32> to vector<8x32xf32>
    %249 = arith.mulf %247, %216 : vector<8x32xf32>
    %250 = arith.mulf %246, %245 : vector<8x32xf32>
    %251 = arith.addf %249, %250 : vector<8x32xf32>
    %252 = math.tanh %251 : vector<8x32xf32>
    %253 = arith.mulf %248, %252 : vector<8x32xf32>
    %254 = vector.extract_strided_slice %237 {offsets = [0, 0], sizes = [8, 96], strides = [1, 1]} : vector<8x128xf32> to vector<8x96xf32>
    %255 = arith.negf %254 : vector<8x96xf32>
    %256 = math.exp %255 : vector<8x96xf32>
    %cst_62 = arith.constant 1.000000e+00 : f32
    %257 = vector.broadcast %cst_62 : f32 to vector<8x96xf32>
    %258 = arith.addf %257, %256 : vector<8x96xf32>
    %259 = arith.divf %257, %258 : vector<8x96xf32>
    %260 = vector.extract_strided_slice %237 {offsets = [0, 96], sizes = [8, 32], strides = [1, 1]} : vector<8x128xf32> to vector<8x32xf32>
    %261 = math.tanh %260 : vector<8x32xf32>
    %262 = vector.extract_strided_slice %259 {offsets = [0, 0], sizes = [8, 32], strides = [1, 1]} : vector<8x96xf32> to vector<8x32xf32>
    %263 = vector.extract_strided_slice %259 {offsets = [0, 32], sizes = [8, 32], strides = [1, 1]} : vector<8x96xf32> to vector<8x32xf32>
    %264 = vector.extract_strided_slice %259 {offsets = [0, 64], sizes = [8, 32], strides = [1, 1]} : vector<8x96xf32> to vector<8x32xf32>
    %265 = arith.mulf %263, %222 : vector<8x32xf32>
    %266 = arith.mulf %262, %261 : vector<8x32xf32>
    %267 = arith.addf %265, %266 : vector<8x32xf32>
    %268 = math.tanh %267 : vector<8x32xf32>
    %269 = arith.mulf %264, %268 : vector<8x32xf32>
    %270 = arith.addi %21, %c3_i32 : i32
    %271 = vector.broadcast %270 : i32 to vector<8x1xi32>
    %272 = arith.cmpi slt, %271, %19 : vector<8x1xi32>
    %273 = arith.addi %23, %223 : i32
    %274 = vector.broadcast %273 : i32 to vector<8x1xi32>
    %275 = arith.cmpi slt, %274, %19 : vector<8x1xi32>
    %276 = vector.shape_cast %272 : vector<8x1xi1> to vector<8x1xi1>
    %277 = vector.broadcast %276 : vector<8x1xi1> to vector<8x32xi1>
    %278 = arith.select %277, %253, %213 : vector<8x32xi1>, vector<8x32xf32>
    %279 = vector.shape_cast %272 : vector<8x1xi1> to vector<8x1xi1>
    %280 = vector.broadcast %279 : vector<8x1xi1> to vector<8x32xi1>
    %281 = arith.select %280, %251, %216 : vector<8x32xi1>, vector<8x32xf32>
    %282 = vector.shape_cast %275 : vector<8x1xi1> to vector<8x1xi1>
    %283 = vector.broadcast %282 : vector<8x1xi1> to vector<8x32xi1>
    %284 = arith.select %283, %269, %219 : vector<8x32xi1>, vector<8x32xf32>
    %285 = vector.shape_cast %275 : vector<8x1xi1> to vector<8x1xi1>
    %286 = vector.broadcast %285 : vector<8x1xi1> to vector<8x32xi1>
    %287 = arith.select %286, %267, %222 : vector<8x32xi1>, vector<8x32xf32>
    %c4_i32 = arith.constant 4 : i32
    %c7_i32_63 = arith.constant 7 : i32
    %288 = arith.subi %c7_i32_63, %c4_i32 : i32
    %c8_i32_64 = arith.constant 8 : i32
    %289 = arith.muli %c4_i32, %c8_i32_64 : i32
    %290 = tpu.assume_multiple %289, 8 : i32
    %c8_i32_65 = arith.constant 8 : i32
    %291 = arith.muli %288, %c8_i32_65 : i32
    %292 = tpu.assume_multiple %291, 8 : i32
    %293 = tpu.concatenate %278, %284 in 1 : vector<8x32xf32>, vector<8x32xf32> -> vector<8x64xf32>
    %cst_66 = arith.constant dense<0.000000e+00> : vector<8x256xf32>
    %294 = tpu.matmul %293, %20, %cst_66 {dimension_numbers = #tpu.dot_dimension_numbers<[1], [0], [0], [1], [0, 0, 1, 1], [], []>} : vector<8x64xf32>, vector<64x256xf32>, vector<8x256xf32> -> vector<8x256xf32>
    %295 = vector.extract_strided_slice %294 {offsets = [0, 0], sizes = [8, 128], strides = [1, 1]} : vector<8x256xf32> to vector<8x128xf32>
    %296 = arith.index_cast %290 : i32 to index
    %c0_67 = arith.constant 0 : index
    %297 = vector.load %arg10[%296, %c0_67] : memref<64x128xf32, #tpu.memory_space<vmem>>, vector<8x128xf32>
    %298 = arith.addf %295, %297 : vector<8x128xf32>
    %299 = vector.extract_strided_slice %294 {offsets = [0, 128], sizes = [8, 128], strides = [1, 1]} : vector<8x256xf32> to vector<8x128xf32>
    %300 = arith.index_cast %292 : i32 to index
    %c0_68 = arith.constant 0 : index
    %301 = vector.load %arg11[%300, %c0_68] : memref<64x128xf32, #tpu.memory_space<vmem>>, vector<8x128xf32>
    %302 = arith.addf %299, %301 : vector<8x128xf32>
    %303 = vector.extract_strided_slice %298 {offsets = [0, 0], sizes = [8, 96], strides = [1, 1]} : vector<8x128xf32> to vector<8x96xf32>
    %304 = arith.negf %303 : vector<8x96xf32>
    %305 = math.exp %304 : vector<8x96xf32>
    %cst_69 = arith.constant 1.000000e+00 : f32
    %306 = vector.broadcast %cst_69 : f32 to vector<8x96xf32>
    %307 = arith.addf %306, %305 : vector<8x96xf32>
    %308 = arith.divf %306, %307 : vector<8x96xf32>
    %309 = vector.extract_strided_slice %298 {offsets = [0, 96], sizes = [8, 32], strides = [1, 1]} : vector<8x128xf32> to vector<8x32xf32>
    %310 = math.tanh %309 : vector<8x32xf32>
    %311 = vector.extract_strided_slice %308 {offsets = [0, 0], sizes = [8, 32], strides = [1, 1]} : vector<8x96xf32> to vector<8x32xf32>
    %312 = vector.extract_strided_slice %308 {offsets = [0, 32], sizes = [8, 32], strides = [1, 1]} : vector<8x96xf32> to vector<8x32xf32>
    %313 = vector.extract_strided_slice %308 {offsets = [0, 64], sizes = [8, 32], strides = [1, 1]} : vector<8x96xf32> to vector<8x32xf32>
    %314 = arith.mulf %312, %281 : vector<8x32xf32>
    %315 = arith.mulf %311, %310 : vector<8x32xf32>
    %316 = arith.addf %314, %315 : vector<8x32xf32>
    %317 = math.tanh %316 : vector<8x32xf32>
    %318 = arith.mulf %313, %317 : vector<8x32xf32>
    %319 = vector.extract_strided_slice %302 {offsets = [0, 0], sizes = [8, 96], strides = [1, 1]} : vector<8x128xf32> to vector<8x96xf32>
    %320 = arith.negf %319 : vector<8x96xf32>
    %321 = math.exp %320 : vector<8x96xf32>
    %cst_70 = arith.constant 1.000000e+00 : f32
    %322 = vector.broadcast %cst_70 : f32 to vector<8x96xf32>
    %323 = arith.addf %322, %321 : vector<8x96xf32>
    %324 = arith.divf %322, %323 : vector<8x96xf32>
    %325 = vector.extract_strided_slice %302 {offsets = [0, 96], sizes = [8, 32], strides = [1, 1]} : vector<8x128xf32> to vector<8x32xf32>
    %326 = math.tanh %325 : vector<8x32xf32>
    %327 = vector.extract_strided_slice %324 {offsets = [0, 0], sizes = [8, 32], strides = [1, 1]} : vector<8x96xf32> to vector<8x32xf32>
    %328 = vector.extract_strided_slice %324 {offsets = [0, 32], sizes = [8, 32], strides = [1, 1]} : vector<8x96xf32> to vector<8x32xf32>
    %329 = vector.extract_strided_slice %324 {offsets = [0, 64], sizes = [8, 32], strides = [1, 1]} : vector<8x96xf32> to vector<8x32xf32>
    %330 = arith.mulf %328, %287 : vector<8x32xf32>
    %331 = arith.mulf %327, %326 : vector<8x32xf32>
    %332 = arith.addf %330, %331 : vector<8x32xf32>
    %333 = math.tanh %332 : vector<8x32xf32>
    %334 = arith.mulf %329, %333 : vector<8x32xf32>
    %335 = arith.addi %21, %c4_i32 : i32
    %336 = vector.broadcast %335 : i32 to vector<8x1xi32>
    %337 = arith.cmpi slt, %336, %19 : vector<8x1xi32>
    %338 = arith.addi %23, %288 : i32
    %339 = vector.broadcast %338 : i32 to vector<8x1xi32>
    %340 = arith.cmpi slt, %339, %19 : vector<8x1xi32>
    %341 = vector.shape_cast %337 : vector<8x1xi1> to vector<8x1xi1>
    %342 = vector.broadcast %341 : vector<8x1xi1> to vector<8x32xi1>
    %343 = arith.select %342, %318, %278 : vector<8x32xi1>, vector<8x32xf32>
    %344 = vector.shape_cast %337 : vector<8x1xi1> to vector<8x1xi1>
    %345 = vector.broadcast %344 : vector<8x1xi1> to vector<8x32xi1>
    %346 = arith.select %345, %316, %281 : vector<8x32xi1>, vector<8x32xf32>
    %347 = vector.shape_cast %340 : vector<8x1xi1> to vector<8x1xi1>
    %348 = vector.broadcast %347 : vector<8x1xi1> to vector<8x32xi1>
    %349 = arith.select %348, %334, %284 : vector<8x32xi1>, vector<8x32xf32>
    %350 = vector.shape_cast %340 : vector<8x1xi1> to vector<8x1xi1>
    %351 = vector.broadcast %350 : vector<8x1xi1> to vector<8x32xi1>
    %352 = arith.select %351, %332, %287 : vector<8x32xi1>, vector<8x32xf32>
    %c5_i32 = arith.constant 5 : i32
    %c7_i32_71 = arith.constant 7 : i32
    %353 = arith.subi %c7_i32_71, %c5_i32 : i32
    %c8_i32_72 = arith.constant 8 : i32
    %354 = arith.muli %c5_i32, %c8_i32_72 : i32
    %355 = tpu.assume_multiple %354, 8 : i32
    %c8_i32_73 = arith.constant 8 : i32
    %356 = arith.muli %353, %c8_i32_73 : i32
    %357 = tpu.assume_multiple %356, 8 : i32
    %358 = tpu.concatenate %343, %349 in 1 : vector<8x32xf32>, vector<8x32xf32> -> vector<8x64xf32>
    %cst_74 = arith.constant dense<0.000000e+00> : vector<8x256xf32>
    %359 = tpu.matmul %358, %20, %cst_74 {dimension_numbers = #tpu.dot_dimension_numbers<[1], [0], [0], [1], [0, 0, 1, 1], [], []>} : vector<8x64xf32>, vector<64x256xf32>, vector<8x256xf32> -> vector<8x256xf32>
    %360 = vector.extract_strided_slice %359 {offsets = [0, 0], sizes = [8, 128], strides = [1, 1]} : vector<8x256xf32> to vector<8x128xf32>
    %361 = arith.index_cast %355 : i32 to index
    %c0_75 = arith.constant 0 : index
    %362 = vector.load %arg10[%361, %c0_75] : memref<64x128xf32, #tpu.memory_space<vmem>>, vector<8x128xf32>
    %363 = arith.addf %360, %362 : vector<8x128xf32>
    %364 = vector.extract_strided_slice %359 {offsets = [0, 128], sizes = [8, 128], strides = [1, 1]} : vector<8x256xf32> to vector<8x128xf32>
    %365 = arith.index_cast %357 : i32 to index
    %c0_76 = arith.constant 0 : index
    %366 = vector.load %arg11[%365, %c0_76] : memref<64x128xf32, #tpu.memory_space<vmem>>, vector<8x128xf32>
    %367 = arith.addf %364, %366 : vector<8x128xf32>
    %368 = vector.extract_strided_slice %363 {offsets = [0, 0], sizes = [8, 96], strides = [1, 1]} : vector<8x128xf32> to vector<8x96xf32>
    %369 = arith.negf %368 : vector<8x96xf32>
    %370 = math.exp %369 : vector<8x96xf32>
    %cst_77 = arith.constant 1.000000e+00 : f32
    %371 = vector.broadcast %cst_77 : f32 to vector<8x96xf32>
    %372 = arith.addf %371, %370 : vector<8x96xf32>
    %373 = arith.divf %371, %372 : vector<8x96xf32>
    %374 = vector.extract_strided_slice %363 {offsets = [0, 96], sizes = [8, 32], strides = [1, 1]} : vector<8x128xf32> to vector<8x32xf32>
    %375 = math.tanh %374 : vector<8x32xf32>
    %376 = vector.extract_strided_slice %373 {offsets = [0, 0], sizes = [8, 32], strides = [1, 1]} : vector<8x96xf32> to vector<8x32xf32>
    %377 = vector.extract_strided_slice %373 {offsets = [0, 32], sizes = [8, 32], strides = [1, 1]} : vector<8x96xf32> to vector<8x32xf32>
    %378 = vector.extract_strided_slice %373 {offsets = [0, 64], sizes = [8, 32], strides = [1, 1]} : vector<8x96xf32> to vector<8x32xf32>
    %379 = arith.mulf %377, %346 : vector<8x32xf32>
    %380 = arith.mulf %376, %375 : vector<8x32xf32>
    %381 = arith.addf %379, %380 : vector<8x32xf32>
    %382 = math.tanh %381 : vector<8x32xf32>
    %383 = arith.mulf %378, %382 : vector<8x32xf32>
    %384 = vector.extract_strided_slice %367 {offsets = [0, 0], sizes = [8, 96], strides = [1, 1]} : vector<8x128xf32> to vector<8x96xf32>
    %385 = arith.negf %384 : vector<8x96xf32>
    %386 = math.exp %385 : vector<8x96xf32>
    %cst_78 = arith.constant 1.000000e+00 : f32
    %387 = vector.broadcast %cst_78 : f32 to vector<8x96xf32>
    %388 = arith.addf %387, %386 : vector<8x96xf32>
    %389 = arith.divf %387, %388 : vector<8x96xf32>
    %390 = vector.extract_strided_slice %367 {offsets = [0, 96], sizes = [8, 32], strides = [1, 1]} : vector<8x128xf32> to vector<8x32xf32>
    %391 = math.tanh %390 : vector<8x32xf32>
    %392 = vector.extract_strided_slice %389 {offsets = [0, 0], sizes = [8, 32], strides = [1, 1]} : vector<8x96xf32> to vector<8x32xf32>
    %393 = vector.extract_strided_slice %389 {offsets = [0, 32], sizes = [8, 32], strides = [1, 1]} : vector<8x96xf32> to vector<8x32xf32>
    %394 = vector.extract_strided_slice %389 {offsets = [0, 64], sizes = [8, 32], strides = [1, 1]} : vector<8x96xf32> to vector<8x32xf32>
    %395 = arith.mulf %393, %352 : vector<8x32xf32>
    %396 = arith.mulf %392, %391 : vector<8x32xf32>
    %397 = arith.addf %395, %396 : vector<8x32xf32>
    %398 = math.tanh %397 : vector<8x32xf32>
    %399 = arith.mulf %394, %398 : vector<8x32xf32>
    %400 = arith.addi %21, %c5_i32 : i32
    %401 = vector.broadcast %400 : i32 to vector<8x1xi32>
    %402 = arith.cmpi slt, %401, %19 : vector<8x1xi32>
    %403 = arith.addi %23, %353 : i32
    %404 = vector.broadcast %403 : i32 to vector<8x1xi32>
    %405 = arith.cmpi slt, %404, %19 : vector<8x1xi32>
    %406 = vector.shape_cast %402 : vector<8x1xi1> to vector<8x1xi1>
    %407 = vector.broadcast %406 : vector<8x1xi1> to vector<8x32xi1>
    %408 = arith.select %407, %383, %343 : vector<8x32xi1>, vector<8x32xf32>
    %409 = vector.shape_cast %402 : vector<8x1xi1> to vector<8x1xi1>
    %410 = vector.broadcast %409 : vector<8x1xi1> to vector<8x32xi1>
    %411 = arith.select %410, %381, %346 : vector<8x32xi1>, vector<8x32xf32>
    %412 = vector.shape_cast %405 : vector<8x1xi1> to vector<8x1xi1>
    %413 = vector.broadcast %412 : vector<8x1xi1> to vector<8x32xi1>
    %414 = arith.select %413, %399, %349 : vector<8x32xi1>, vector<8x32xf32>
    %415 = vector.shape_cast %405 : vector<8x1xi1> to vector<8x1xi1>
    %416 = vector.broadcast %415 : vector<8x1xi1> to vector<8x32xi1>
    %417 = arith.select %416, %397, %352 : vector<8x32xi1>, vector<8x32xf32>
    %c6_i32 = arith.constant 6 : i32
    %c7_i32_79 = arith.constant 7 : i32
    %418 = arith.subi %c7_i32_79, %c6_i32 : i32
    %c8_i32_80 = arith.constant 8 : i32
    %419 = arith.muli %c6_i32, %c8_i32_80 : i32
    %420 = tpu.assume_multiple %419, 8 : i32
    %c8_i32_81 = arith.constant 8 : i32
    %421 = arith.muli %418, %c8_i32_81 : i32
    %422 = tpu.assume_multiple %421, 8 : i32
    %423 = tpu.concatenate %408, %414 in 1 : vector<8x32xf32>, vector<8x32xf32> -> vector<8x64xf32>
    %cst_82 = arith.constant dense<0.000000e+00> : vector<8x256xf32>
    %424 = tpu.matmul %423, %20, %cst_82 {dimension_numbers = #tpu.dot_dimension_numbers<[1], [0], [0], [1], [0, 0, 1, 1], [], []>} : vector<8x64xf32>, vector<64x256xf32>, vector<8x256xf32> -> vector<8x256xf32>
    %425 = vector.extract_strided_slice %424 {offsets = [0, 0], sizes = [8, 128], strides = [1, 1]} : vector<8x256xf32> to vector<8x128xf32>
    %426 = arith.index_cast %420 : i32 to index
    %c0_83 = arith.constant 0 : index
    %427 = vector.load %arg10[%426, %c0_83] : memref<64x128xf32, #tpu.memory_space<vmem>>, vector<8x128xf32>
    %428 = arith.addf %425, %427 : vector<8x128xf32>
    %429 = vector.extract_strided_slice %424 {offsets = [0, 128], sizes = [8, 128], strides = [1, 1]} : vector<8x256xf32> to vector<8x128xf32>
    %430 = arith.index_cast %422 : i32 to index
    %c0_84 = arith.constant 0 : index
    %431 = vector.load %arg11[%430, %c0_84] : memref<64x128xf32, #tpu.memory_space<vmem>>, vector<8x128xf32>
    %432 = arith.addf %429, %431 : vector<8x128xf32>
    %433 = vector.extract_strided_slice %428 {offsets = [0, 0], sizes = [8, 96], strides = [1, 1]} : vector<8x128xf32> to vector<8x96xf32>
    %434 = arith.negf %433 : vector<8x96xf32>
    %435 = math.exp %434 : vector<8x96xf32>
    %cst_85 = arith.constant 1.000000e+00 : f32
    %436 = vector.broadcast %cst_85 : f32 to vector<8x96xf32>
    %437 = arith.addf %436, %435 : vector<8x96xf32>
    %438 = arith.divf %436, %437 : vector<8x96xf32>
    %439 = vector.extract_strided_slice %428 {offsets = [0, 96], sizes = [8, 32], strides = [1, 1]} : vector<8x128xf32> to vector<8x32xf32>
    %440 = math.tanh %439 : vector<8x32xf32>
    %441 = vector.extract_strided_slice %438 {offsets = [0, 0], sizes = [8, 32], strides = [1, 1]} : vector<8x96xf32> to vector<8x32xf32>
    %442 = vector.extract_strided_slice %438 {offsets = [0, 32], sizes = [8, 32], strides = [1, 1]} : vector<8x96xf32> to vector<8x32xf32>
    %443 = vector.extract_strided_slice %438 {offsets = [0, 64], sizes = [8, 32], strides = [1, 1]} : vector<8x96xf32> to vector<8x32xf32>
    %444 = arith.mulf %442, %411 : vector<8x32xf32>
    %445 = arith.mulf %441, %440 : vector<8x32xf32>
    %446 = arith.addf %444, %445 : vector<8x32xf32>
    %447 = math.tanh %446 : vector<8x32xf32>
    %448 = arith.mulf %443, %447 : vector<8x32xf32>
    %449 = vector.extract_strided_slice %432 {offsets = [0, 0], sizes = [8, 96], strides = [1, 1]} : vector<8x128xf32> to vector<8x96xf32>
    %450 = arith.negf %449 : vector<8x96xf32>
    %451 = math.exp %450 : vector<8x96xf32>
    %cst_86 = arith.constant 1.000000e+00 : f32
    %452 = vector.broadcast %cst_86 : f32 to vector<8x96xf32>
    %453 = arith.addf %452, %451 : vector<8x96xf32>
    %454 = arith.divf %452, %453 : vector<8x96xf32>
    %455 = vector.extract_strided_slice %432 {offsets = [0, 96], sizes = [8, 32], strides = [1, 1]} : vector<8x128xf32> to vector<8x32xf32>
    %456 = math.tanh %455 : vector<8x32xf32>
    %457 = vector.extract_strided_slice %454 {offsets = [0, 0], sizes = [8, 32], strides = [1, 1]} : vector<8x96xf32> to vector<8x32xf32>
    %458 = vector.extract_strided_slice %454 {offsets = [0, 32], sizes = [8, 32], strides = [1, 1]} : vector<8x96xf32> to vector<8x32xf32>
    %459 = vector.extract_strided_slice %454 {offsets = [0, 64], sizes = [8, 32], strides = [1, 1]} : vector<8x96xf32> to vector<8x32xf32>
    %460 = arith.mulf %458, %417 : vector<8x32xf32>
    %461 = arith.mulf %457, %456 : vector<8x32xf32>
    %462 = arith.addf %460, %461 : vector<8x32xf32>
    %463 = math.tanh %462 : vector<8x32xf32>
    %464 = arith.mulf %459, %463 : vector<8x32xf32>
    %465 = arith.addi %21, %c6_i32 : i32
    %466 = vector.broadcast %465 : i32 to vector<8x1xi32>
    %467 = arith.cmpi slt, %466, %19 : vector<8x1xi32>
    %468 = arith.addi %23, %418 : i32
    %469 = vector.broadcast %468 : i32 to vector<8x1xi32>
    %470 = arith.cmpi slt, %469, %19 : vector<8x1xi32>
    %471 = vector.shape_cast %467 : vector<8x1xi1> to vector<8x1xi1>
    %472 = vector.broadcast %471 : vector<8x1xi1> to vector<8x32xi1>
    %473 = arith.select %472, %448, %408 : vector<8x32xi1>, vector<8x32xf32>
    %474 = vector.shape_cast %467 : vector<8x1xi1> to vector<8x1xi1>
    %475 = vector.broadcast %474 : vector<8x1xi1> to vector<8x32xi1>
    %476 = arith.select %475, %446, %411 : vector<8x32xi1>, vector<8x32xf32>
    %477 = vector.shape_cast %470 : vector<8x1xi1> to vector<8x1xi1>
    %478 = vector.broadcast %477 : vector<8x1xi1> to vector<8x32xi1>
    %479 = arith.select %478, %464, %414 : vector<8x32xi1>, vector<8x32xf32>
    %480 = vector.shape_cast %470 : vector<8x1xi1> to vector<8x1xi1>
    %481 = vector.broadcast %480 : vector<8x1xi1> to vector<8x32xi1>
    %482 = arith.select %481, %462, %417 : vector<8x32xi1>, vector<8x32xf32>
    %c7_i32_87 = arith.constant 7 : i32
    %c7_i32_88 = arith.constant 7 : i32
    %483 = arith.subi %c7_i32_88, %c7_i32_87 : i32
    %c8_i32_89 = arith.constant 8 : i32
    %484 = arith.muli %c7_i32_87, %c8_i32_89 : i32
    %485 = tpu.assume_multiple %484, 8 : i32
    %c8_i32_90 = arith.constant 8 : i32
    %486 = arith.muli %483, %c8_i32_90 : i32
    %487 = tpu.assume_multiple %486, 8 : i32
    %488 = tpu.concatenate %473, %479 in 1 : vector<8x32xf32>, vector<8x32xf32> -> vector<8x64xf32>
    %cst_91 = arith.constant dense<0.000000e+00> : vector<8x256xf32>
    %489 = tpu.matmul %488, %20, %cst_91 {dimension_numbers = #tpu.dot_dimension_numbers<[1], [0], [0], [1], [0, 0, 1, 1], [], []>} : vector<8x64xf32>, vector<64x256xf32>, vector<8x256xf32> -> vector<8x256xf32>
    %490 = vector.extract_strided_slice %489 {offsets = [0, 0], sizes = [8, 128], strides = [1, 1]} : vector<8x256xf32> to vector<8x128xf32>
    %491 = arith.index_cast %485 : i32 to index
    %c0_92 = arith.constant 0 : index
    %492 = vector.load %arg10[%491, %c0_92] : memref<64x128xf32, #tpu.memory_space<vmem>>, vector<8x128xf32>
    %493 = arith.addf %490, %492 : vector<8x128xf32>
    %494 = vector.extract_strided_slice %489 {offsets = [0, 128], sizes = [8, 128], strides = [1, 1]} : vector<8x256xf32> to vector<8x128xf32>
    %495 = arith.index_cast %487 : i32 to index
    %c0_93 = arith.constant 0 : index
    %496 = vector.load %arg11[%495, %c0_93] : memref<64x128xf32, #tpu.memory_space<vmem>>, vector<8x128xf32>
    %497 = arith.addf %494, %496 : vector<8x128xf32>
    %498 = vector.extract_strided_slice %493 {offsets = [0, 0], sizes = [8, 96], strides = [1, 1]} : vector<8x128xf32> to vector<8x96xf32>
    %499 = arith.negf %498 : vector<8x96xf32>
    %500 = math.exp %499 : vector<8x96xf32>
    %cst_94 = arith.constant 1.000000e+00 : f32
    %501 = vector.broadcast %cst_94 : f32 to vector<8x96xf32>
    %502 = arith.addf %501, %500 : vector<8x96xf32>
    %503 = arith.divf %501, %502 : vector<8x96xf32>
    %504 = vector.extract_strided_slice %493 {offsets = [0, 96], sizes = [8, 32], strides = [1, 1]} : vector<8x128xf32> to vector<8x32xf32>
    %505 = math.tanh %504 : vector<8x32xf32>
    %506 = vector.extract_strided_slice %503 {offsets = [0, 0], sizes = [8, 32], strides = [1, 1]} : vector<8x96xf32> to vector<8x32xf32>
    %507 = vector.extract_strided_slice %503 {offsets = [0, 32], sizes = [8, 32], strides = [1, 1]} : vector<8x96xf32> to vector<8x32xf32>
    %508 = vector.extract_strided_slice %503 {offsets = [0, 64], sizes = [8, 32], strides = [1, 1]} : vector<8x96xf32> to vector<8x32xf32>
    %509 = arith.mulf %507, %476 : vector<8x32xf32>
    %510 = arith.mulf %506, %505 : vector<8x32xf32>
    %511 = arith.addf %509, %510 : vector<8x32xf32>
    %512 = math.tanh %511 : vector<8x32xf32>
    %513 = arith.mulf %508, %512 : vector<8x32xf32>
    %514 = vector.extract_strided_slice %497 {offsets = [0, 0], sizes = [8, 96], strides = [1, 1]} : vector<8x128xf32> to vector<8x96xf32>
    %515 = arith.negf %514 : vector<8x96xf32>
    %516 = math.exp %515 : vector<8x96xf32>
    %cst_95 = arith.constant 1.000000e+00 : f32
    %517 = vector.broadcast %cst_95 : f32 to vector<8x96xf32>
    %518 = arith.addf %517, %516 : vector<8x96xf32>
    %519 = arith.divf %517, %518 : vector<8x96xf32>
    %520 = vector.extract_strided_slice %497 {offsets = [0, 96], sizes = [8, 32], strides = [1, 1]} : vector<8x128xf32> to vector<8x32xf32>
    %521 = math.tanh %520 : vector<8x32xf32>
    %522 = vector.extract_strided_slice %519 {offsets = [0, 0], sizes = [8, 32], strides = [1, 1]} : vector<8x96xf32> to vector<8x32xf32>
    %523 = vector.extract_strided_slice %519 {offsets = [0, 32], sizes = [8, 32], strides = [1, 1]} : vector<8x96xf32> to vector<8x32xf32>
    %524 = vector.extract_strided_slice %519 {offsets = [0, 64], sizes = [8, 32], strides = [1, 1]} : vector<8x96xf32> to vector<8x32xf32>
    %525 = arith.mulf %523, %482 : vector<8x32xf32>
    %526 = arith.mulf %522, %521 : vector<8x32xf32>
    %527 = arith.addf %525, %526 : vector<8x32xf32>
    %528 = math.tanh %527 : vector<8x32xf32>
    %529 = arith.mulf %524, %528 : vector<8x32xf32>
    %530 = arith.addi %21, %c7_i32_87 : i32
    %531 = vector.broadcast %530 : i32 to vector<8x1xi32>
    %532 = arith.cmpi slt, %531, %19 : vector<8x1xi32>
    %533 = arith.addi %23, %483 : i32
    %534 = vector.broadcast %533 : i32 to vector<8x1xi32>
    %535 = arith.cmpi slt, %534, %19 : vector<8x1xi32>
    %536 = vector.shape_cast %532 : vector<8x1xi1> to vector<8x1xi1>
    %537 = vector.broadcast %536 : vector<8x1xi1> to vector<8x32xi1>
    %538 = arith.select %537, %513, %473 : vector<8x32xi1>, vector<8x32xf32>
    %539 = vector.shape_cast %532 : vector<8x1xi1> to vector<8x1xi1>
    %540 = vector.broadcast %539 : vector<8x1xi1> to vector<8x32xi1>
    %541 = arith.select %540, %511, %476 : vector<8x32xi1>, vector<8x32xf32>
    %542 = vector.shape_cast %535 : vector<8x1xi1> to vector<8x1xi1>
    %543 = vector.broadcast %542 : vector<8x1xi1> to vector<8x32xi1>
    %544 = arith.select %543, %529, %479 : vector<8x32xi1>, vector<8x32xf32>
    %545 = vector.shape_cast %535 : vector<8x1xi1> to vector<8x1xi1>
    %546 = vector.broadcast %545 : vector<8x1xi1> to vector<8x32xi1>
    %547 = arith.select %546, %527, %482 : vector<8x32xi1>, vector<8x32xf32>
    %c8_i32_96 = arith.constant 8 : i32
    %c0_97 = arith.constant 0 : index
    %c0_98 = arith.constant 0 : index
    %548 = vector.load %arg12[%c0_97, %c0_98] : memref<8x32xf32, #tpu.memory_space<vmem>>, vector<8x32xf32>
    tpu.vector_store %arg12[%c0_97, %c0_98], %538 {strides = array<i32>} : memref<8x32xf32, #tpu.memory_space<vmem>>, vector<8x32xf32>,
    %c0_99 = arith.constant 0 : index
    %c0_100 = arith.constant 0 : index
    %549 = vector.load %arg13[%c0_99, %c0_100] : memref<8x32xf32, #tpu.memory_space<vmem>>, vector<8x32xf32>
    tpu.vector_store %arg13[%c0_99, %c0_100], %541 {strides = array<i32>} : memref<8x32xf32, #tpu.memory_space<vmem>>, vector<8x32xf32>,
    %c0_101 = arith.constant 0 : index
    %c0_102 = arith.constant 0 : index
    %550 = vector.load %arg14[%c0_101, %c0_102] : memref<8x32xf32, #tpu.memory_space<vmem>>, vector<8x32xf32>
    tpu.vector_store %arg14[%c0_101, %c0_102], %544 {strides = array<i32>} : memref<8x32xf32, #tpu.memory_space<vmem>>, vector<8x32xf32>,
    %c0_103 = arith.constant 0 : index
    %c0_104 = arith.constant 0 : index
    %551 = vector.load %arg15[%c0_103, %c0_104] : memref<8x32xf32, #tpu.memory_space<vmem>>, vector<8x32xf32>
    tpu.vector_store %arg15[%c0_103, %c0_104], %547 {strides = array<i32>} : memref<8x32xf32, #tpu.memory_space<vmem>>, vector<8x32xf32>,
    %c0_i32_105 = arith.constant 0 : i32
    %552 = arith.cmpi eq, %arg0, %c0_i32_105 : i32
    %553 = arith.extui %552 : i1 to i32
    %c0_i32_106 = arith.constant 0 : i32
    %554 = arith.cmpi ne, %553, %c0_i32_106 : i32
    scf.if %554 {
      %555 = tpu.concatenate %538, %544 in 1 : vector<8x32xf32>, vector<8x32xf32> -> vector<8x64xf32>
      %c0_107 = arith.constant 0 : index
      %c0_108 = arith.constant 0 : index
      %556 = vector.load %arg9[%c0_107, %c0_108] : memref<8x64xf32, #tpu.memory_space<vmem>>, vector<8x64xf32>
      tpu.vector_store %arg9[%c0_107, %c0_108], %555 {strides = array<i32>} : memref<8x64xf32, #tpu.memory_space<vmem>>, vector<8x64xf32>,
    } else {
    }
    return
  }
  func.func @transform_0(%arg0: i32) -> (i32, i32) {
    %c0_i32 = arith.constant 0 : i32
    %c0_i32_0 = arith.constant 0 : i32
    return %arg0, %c0_i32 : i32, i32
  }
  func.func @transform_1(%arg0: i32) -> (i32, i32) {
    %c0_i32 = arith.constant 0 : i32
    %0 = arith.subi %c0_i32, %arg0 : i32
    %c0_i32_0 = arith.constant 0 : i32
    %c0_i32_1 = arith.constant 0 : i32
    return %0, %c0_i32_0 : i32, i32
  }
  func.func @transform_2(%arg0: i32) -> (i32, i32) {
    %c0_i32 = arith.constant 0 : i32
    %c0_i32_0 = arith.constant 0 : i32
    %c0_i32_1 = arith.constant 0 : i32
    return %c0_i32, %c0_i32_0 : i32, i32
  }
  func.func @transform_3(%arg0: i32) -> (i32, i32) {
    %c0_i32 = arith.constant 0 : i32
    %c0_i32_0 = arith.constant 0 : i32
    %c0_i32_1 = arith.constant 0 : i32
    return %c0_i32, %c0_i32_0 : i32, i32
  }
  func.func @transform_4(%arg0: i32) -> (i32, i32) {
    %c0_i32 = arith.constant 0 : i32
    %c0_i32_0 = arith.constant 0 : i32
    %c0_i32_1 = arith.constant 0 : i32
    return %c0_i32, %c0_i32_0 : i32, i32
  }
  func.func @transform_5(%arg0: i32) -> (i32, i32) {
    %c0_i32 = arith.constant 0 : i32
    %c0_i32_0 = arith.constant 0 : i32
    %c0_i32_1 = arith.constant 0 : i32
    return %c0_i32, %c0_i32_0 : i32, i32
  }
  func.func @transform_6(%arg0: i32) -> (i32, i32) {
    %c0_i32 = arith.constant 0 : i32
    %c0_i32_0 = arith.constant 0 : i32
    %c0_i32_1 = arith.constant 0 : i32
    return %c0_i32, %c0_i32_0 : i32, i32
  }
  func.func @transform_7(%arg0: i32) -> (i32, i32) {
    %c0_i32 = arith.constant 0 : i32
    %c0_i32_0 = arith.constant 0 : i32
    %c0_i32_1 = arith.constant 0 : i32
    return %c0_i32, %c0_i32_0 : i32, i32
  }
  func.func @transform_8(%arg0: i32) -> (i32, i32) {
    %c0_i32 = arith.constant 0 : i32
    %c0_i32_0 = arith.constant 0 : i32
    %c0_i32_1 = arith.constant 0 : i32
    return %c0_i32, %c0_i32_0 : i32, i32
  }
}

</mosaic_0001>

<llo_original>
// kernel: ser_rnn_encoder_forward.1
$region0: #{ser_rnn_encoder_forward.1}
  #allocation0 [shape = 'u32[]', space=smem, size = 0x4, offset = 0x4, fixed_abs, tag = 'smem constant byte address 0x4 - core index']
  #allocation1 [shape = 'u32[144,128]{1,0:T(1,128)}', space=vmem, size = 0x12000, scoped, tag = 'internal scratch']
  #allocation2 [shape = 'f32[64,128]{1,0:T(8,128)}', space=vmem, size = 0x8000, scoped, tag = 'scratch operand']
  #allocation3 [shape = 'f32[64,128]{1,0:T(8,128)}', space=vmem, size = 0x8000, scoped, tag = 'scratch operand']
  #allocation4 [shape = 'f32[8,32]{1,0:T(8,128)}', space=vmem, size = 0x1000, scoped, tag = 'scratch operand']
  #allocation5 [shape = 'f32[8,32]{1,0:T(8,128)}', space=vmem, size = 0x1000, scoped, tag = 'scratch operand']
  #allocation6 [shape = 'f32[8,32]{1,0:T(8,128)}', space=vmem, size = 0x1000, scoped, tag = 'scratch operand']
  #allocation7 [shape = 'f32[8,32]{1,0:T(8,128)}', space=vmem, size = 0x1000, scoped, tag = 'scratch operand']
  %s0 = inlined_call_operand.vmem [shape: f32[64,16], index: 0, kind: input, shape index: {}, may-alias: {0,1}]
  %s1 = inlined_call_operand.vmem [shape: f32[64,16], index: 1, kind: input, shape index: {}, may-alias: {0,1}]
  %s2 = inlined_call_operand.vmem [shape: s32[8,1], index: 2, kind: input, shape index: {}]
  %s3 = inlined_call_operand.vmem [shape: f32[16,128], index: 3, kind: input, shape index: {}]
  %s4 = inlined_call_operand.vmem [shape: f32[16,128], index: 4, kind: input, shape index: {}]
  %s5 = inlined_call_operand.vmem [shape: f32[1,128], index: 5, kind: input, shape index: {}]
  %s6 = inlined_call_operand.vmem [shape: f32[1,128], index: 6, kind: input, shape index: {}]
  %s7 = inlined_call_operand.vmem [shape: f32[64,256], index: 7, kind: input, shape index: {}]
  %s8 = inlined_call_operand.vmem [shape: f32[8,64], index: 8, kind: output, shape index: {}]
  %s9 = sld [smem:[#allocation0]]
  $region50: #{ser_rnn_encoder_forward.1} parent=0
    _
  %s11 = ssub.s32 1, %s9
  %s12 = scalar_select 0, %s11, %s9
  // Predicated region
  $region2: #{ser_rnn_encoder_forward.1} parent=0 // pred_check
    _
  $region3: #{ser_rnn_encoder_forward.1} parent=0 // pred_check_branch
    %14 = sbr.rel (0) target = $region5
  $region4: #{ser_rnn_encoder_forward.1} parent=0 // pred_region
    _
  $region5: #{ser_rnn_encoder_forward.1} parent=0 // pred_fallthru
    _
  // Predicated region
  $region6: #{ser_rnn_encoder_forward.1} parent=0 // pred_check
    _
  $region7: #{ser_rnn_encoder_forward.1} parent=0 // pred_check_branch
    %16 = sbr.rel (0) target = $region9
  $region8: #{ser_rnn_encoder_forward.1} parent=0 // pred_region
    %s17 = ssub.s32 0, 0
    %s18 = smul.u32 8, %s17
    %p19 = scmp.lt.s32.totalorder %s18, 7
    %s20 = scalar_select %p19, %s18, 7
    %s21 = smul.addr %s20, 8
    %s22 = scalar_lea.vmem %s1, %s21
    %s23 = ssub.s32 0, 0
    %s24 = smul.u32 8, %s23
  $region9: #{ser_rnn_encoder_forward.1} parent=0 // pred_fallthru
    _
  // Predicated region
  $region10: #{ser_rnn_encoder_forward.1} parent=0 // pred_check
    _
  $region11: #{ser_rnn_encoder_forward.1} parent=0 // pred_check_branch
    %26 = sbr.rel (0) target = $region13
  $region12: #{ser_rnn_encoder_forward.1} parent=0 // pred_region
    _
  $region13: #{ser_rnn_encoder_forward.1} parent=0 // pred_fallthru
    _
  // Predicated region
  $region14: #{ser_rnn_encoder_forward.1} parent=0 // pred_check
    _
  $region15: #{ser_rnn_encoder_forward.1} parent=0 // pred_check_branch
    %28 = sbr.rel (0) target = $region17
  $region16: #{ser_rnn_encoder_forward.1} parent=0 // pred_region
    _
  $region17: #{ser_rnn_encoder_forward.1} parent=0 // pred_fallthru
    _
  // Predicated region
  $region18: #{ser_rnn_encoder_forward.1} parent=0 // pred_check
    _
  $region19: #{ser_rnn_encoder_forward.1} parent=0 // pred_check_branch
    %30 = sbr.rel (0) target = $region21
  $region20: #{ser_rnn_encoder_forward.1} parent=0 // pred_region
    _
  $region21: #{ser_rnn_encoder_forward.1} parent=0 // pred_fallthru
    _
  // Predicated region
  $region22: #{ser_rnn_encoder_forward.1} parent=0 // pred_check
    _
  $region23: #{ser_rnn_encoder_forward.1} parent=0 // pred_check_branch
    %32 = sbr.rel (0) target = $region25
  $region24: #{ser_rnn_encoder_forward.1} parent=0 // pred_region
    _
  $region25: #{ser_rnn_encoder_forward.1} parent=0 // pred_fallthru
    _
  // Predicated region
  $region26: #{ser_rnn_encoder_forward.1} parent=0 // pred_check
    _
  $region27: #{ser_rnn_encoder_forward.1} parent=0 // pred_check_branch
    %34 = sbr.rel (0) target = $region29
  $region28: #{ser_rnn_encoder_forward.1} parent=0 // pred_region
    _
  $region29: #{ser_rnn_encoder_forward.1} parent=0 // pred_fallthru
    _
  // Predicated region
  $region30: #{ser_rnn_encoder_forward.1} parent=0 // pred_check
    _
  $region31: #{ser_rnn_encoder_forward.1} parent=0 // pred_check_branch
    %36 = sbr.rel (0) target = $region33
  $region32: #{ser_rnn_encoder_forward.1} parent=0 // pred_region
    _
  $region33: #{ser_rnn_encoder_forward.1} parent=0 // pred_fallthru
    _
  %s37 = ssub.s32 0, 0
  %s38 = smul.u32 8, %s37
  %p39 = scmp.lt.s32.totalorder %s38, 7
  %s40 = scalar_select %p39, %s38, 7
  %s41 = smul.addr %s40, 8
  %s42 = scalar_lea.vmem %s1, %s41
  %s43 = ssub.s32 0, 0
  %s44 = smul.u32 8, %s43
  %p45 = scmp.lt.s32.totalorder %s44, 7
  %s46 = scalar_select %p45, %s44, 7
  %s47 = smul.addr %s46, 8
  %s48 = scalar_lea.vmem %s1, %s47
  %s49 = ssub.s32 0, 0
  %s50 = smul.u32 8, %s49
  %p51 = scmp.eq.s32.totalorder 0, 0
  // Predicated region
  $region34: #{ser_rnn_encoder_forward.1} parent=0 // pred_check
    %p52 = pneg %p51
  $region35: #{ser_rnn_encoder_forward.1} parent=0 // pred_check_branch
    %54 = sbr.rel (%p52) target = $region37
  $region36: #{ser_rnn_encoder_forward.1} parent=0 // pred_region
    %vm55 = vcmask 261120
    %56 = vst.msk [vmem:[#allocation4] sm:$0xff] %vm55, 0.0
    %57 = vst.msk [vmem:[#allocation5] sm:$0xff] %vm55, 0.0
    %58 = vst.msk [vmem:[#allocation6] sm:$0xff] %vm55, 0.0
    %59 = vst.msk [vmem:[#allocation7] sm:$0xff] %vm55, 0.0
  $region37: #{ser_rnn_encoder_forward.1} parent=0 // pred_fallthru
    _
  %v60 = vld [vmem:[%s0] sm:$0xff]
  %v61 = vld [vmem:[%s0 + $0x8] sm:$0xff]
  %v62 = vld [vmem:[%s0 + $0x10] sm:$0xff]
  %v63 = vld [vmem:[%s0 + $0x18] sm:$0xff]
  %v64 = vld [vmem:[%s0 + $0x20] sm:$0xff]
  %v65 = vld [vmem:[%s0 + $0x28] sm:$0xff]
  %v66 = vld [vmem:[%s0 + $0x30] sm:$0xff]
  %v67 = vld [vmem:[%s0 + $0x38] sm:$0xff]
  %v68 = vtanh.pop %v60
  %v69 = vtanh.pop %v61
  %v70 = vtanh.pop %v62
  %v71 = vtanh.pop %v63
  %v72 = vtanh.pop %v64
  %v73 = vtanh.pop %v65
  %v74 = vtanh.pop %v66
  %v75 = vtanh.pop %v67
  %v76 = vld [vmem:[%s3] sm:$0xff]
  %v77 = vld [vmem:[%s3 + $0x8] sm:$0xff]
  %v78 = vld [vmem:[%s5] sm:$0x1]
  %v80 = vlaneseq
  %v81 = vshrl.u32 %v80, 7
  %v82 = vsub.s32 0, %v81
  %v83 = vrot.slane %v78, %v82
  %vm85 = vcmask 130048
  %v87 = vsel %vm85, %v68, 0
  %v90 = vsel %vm85, %v69, 0
  %v93 = vsel %vm85, %v70, 0
  %v96 = vsel %vm85, %v71, 0
  %v99 = vsel %vm85, %v72, 0
  %v102 = vsel %vm85, %v73, 0
  %v105 = vsel %vm85, %v74, 0
  %v108 = vsel %vm85, %v75, 0
  %110 = vmatprep.subr.mxu0 0.0
  %111 = vmatpush1.msra.mxu0 %v76
  %112 = vmatprep.subr.mxu0 0.0
  %113 = vmatpush1.msra.mxu0 %v77
  %114 = vmatprep.subr.mxu0 0.0
  %115 = vmatpush1.msra.mxu0 0.0
  %116 = vmatprep.subr.mxu0 0.0
  %117 = vmatpush1.msra.mxu0 0.0
  %118 = vmatprep.subr.mxu0 0.0
  %119 = vmatpush1.msra.mxu0 0.0
  %120 = vmatprep.subr.mxu0 0.0
  %121 = vmatpush1.msra.mxu0 0.0
  %122 = vmatprep.subr.mxu0 0.0
  %123 = vmatpush1.msra.mxu0 0.0
  %124 = vmatprep.subr.mxu0 0.0
  %125 = vmatpush1.msra.mxu0 0.0
  %126 = vmatprep.subr.mxu0 0.0
  %127 = vmatpush1.msra.mxu0 0.0
  %128 = vmatprep.subr.mxu0 0.0
  %129 = vmatpush1.msra.mxu0 0.0
  %130 = vmatprep.subr.mxu0 0.0
  %131 = vmatpush1.msra.mxu0 0.0
  %132 = vmatprep.subr.mxu0 0.0
  %133 = vmatpush1.msra.mxu0 0.0
  %134 = vmatprep.subr.mxu0 0.0
  %135 = vmatpush1.msra.mxu0 0.0
  %136 = vmatprep.subr.mxu0 0.0
  %137 = vmatpush1.msra.mxu0 0.0
  %138 = vmatprep.subr.mxu0 0.0
  %139 = vmatpush1.msra.mxu0 0.0
  %140 = vmatprep.subr.mxu0 0.0
  %141 = vmatpush1.msra.mxu0 0.0
  %142 = vmatprep.subr.mxu0 0.0
  %143 = vmatpush1.msra.mxu0 0.0
  %144 = vmatprep.subr.mxu0 0.0
  %145 = vmatpush1.msra.mxu0 0.0
  %146 = vmatprep.subr.mxu0 0.0
  %147 = vmatpush1.msra.mxu0 0.0
  %148 = vmatprep.subr.mxu0 0.0
  %149 = vmatpush1.msra.mxu0 0.0
  %150 = vmatprep.subr.mxu0 0.0
  %151 = vmatpush1.msra.mxu0 0.0
  %152 = vmatprep.subr.mxu0 0.0
  %153 = vmatpush1.msra.mxu0 0.0
  %154 = vmatprep.subr.mxu0 0.0
  %155 = vmatpush1.msra.mxu0 0.0
  %156 = vmatprep.subr.mxu0 0.0
  %157 = vmatpush1.msra.mxu0 0.0
  %158 = vmatprep.subr.mxu0 0.0
  %159 = vmatpush1.msra.mxu0 0.0
  %160 = vmatprep.subr.mxu0 0.0
  %161 = vmatpush1.msra.mxu0 0.0
  %162 = vmatprep.subr.mxu0 0.0
  %163 = vmatpush1.msra.mxu0 0.0
  %164 = vmatprep.subr.mxu0 0.0
  %165 = vmatpush1.msra.mxu0 0.0
  %166 = vmatprep.subr.mxu0 0.0
  %167 = vmatpush1.msra.mxu0 0.0
  %168 = vmatprep.subr.mxu0 0.0
  %169 = vmatpush1.msra.mxu0 0.0
  %170 = vmatprep.subr.mxu0 0.0
  %171 = vmatpush1.msra.mxu0 0.0
  %172 = vmatprep.subr.mxu0 0.0
  %173 = vmatpush1.msra.mxu0 0.0
  %174 = vmatprep.mubr.f32.mxu0 0.0
  %175 = vmatmul.mubr.f32.gmra.mrb[0].mxu0 %v87
  %v176 = vpop.f32.mrb[0].mxu0
  %v177 = vadd.f32 %v83, %v176
  %v178 = vpop.f32.mrb[0].mxu0
  %179 = vmatprep.mubr.f32.mxu0 0.0
  %180 = vmatmul.mubr.f32.gmra.mrb[0].mxu0 %v90
  %v181 = vpop.f32.mrb[0].mxu0
  %v182 = vadd.f32 %v83, %v181
  %v183 = vpop.f32.mrb[0].mxu0
  %184 = vmatprep.mubr.f32.mxu0 0.0
  %185 = vmatmul.mubr.f32.gmra.mrb[0].mxu0 %v93
  %v186 = vpop.f32.mrb[0].mxu0
  %v187 = vadd.f32 %v83, %v186
  %v188 = vpop.f32.mrb[0].mxu0
  %189 = vmatprep.mubr.f32.mxu0 0.0
  %190 = vmatmul.mubr.f32.gmra.mrb[0].mxu0 %v96
  %v191 = vpop.f32.mrb[0].mxu0
  %v192 = vadd.f32 %v83, %v191
  %v193 = vpop.f32.mrb[0].mxu0
  %194 = vmatprep.mubr.f32.mxu0 0.0
  %195 = vmatmul.mubr.f32.gmra.mrb[0].mxu0 %v99
  %v196 = vpop.f32.mrb[0].mxu0
  %v197 = vadd.f32 %v83, %v196
  %v198 = vpop.f32.mrb[0].mxu0
  %199 = vmatprep.mubr.f32.mxu0 0.0
  %200 = vmatmul.mubr.f32.gmra.mrb[0].mxu0 %v102
  %v201 = vpop.f32.mrb[0].mxu0
  %v202 = vadd.f32 %v83, %v201
  %v203 = vpop.f32.mrb[0].mxu0
  %204 = vmatprep.mubr.f32.mxu0 0.0
  %205 = vmatmul.mubr.f32.gmra.mrb[0].mxu0 %v105
  %v206 = vpop.f32.mrb[0].mxu0
  %v207 = vadd.f32 %v83, %v206
  %v208 = vpop.f32.mrb[0].mxu0
  %209 = vmatprep.mubr.f32.mxu0 0.0
  %210 = vmatmul.mubr.f32.gmra.mrb[0].mxu0 %v108
  %v211 = vpop.f32.mrb[0].mxu0
  %v212 = vadd.f32 %v83, %v211
  %v213 = vpop.f32.mrb[0].mxu0
  %214 = vdwg.mxu0
  %215 = vst [vmem:[#allocation2] sm:$0xff] %v177
  %216 = vst [vmem:[#allocation2 + $0x8] sm:$0xff] %v182
  %217 = vst [vmem:[#allocation2 + $0x10] sm:$0xff] %v187
  %218 = vst [vmem:[#allocation2 + $0x18] sm:$0xff] %v192
  %219 = vst [vmem:[#allocation2 + $0x20] sm:$0xff] %v197
  %220 = vst [vmem:[#allocation2 + $0x28] sm:$0xff] %v202
  %221 = vst [vmem:[#allocation2 + $0x30] sm:$0xff] %v207
  %222 = vst [vmem:[#allocation2 + $0x38] sm:$0xff] %v212
  %v223 = vld [vmem:[%s48] sm:$0xff]
  %v224 = vld [vmem:[%s48 + $0x8] sm:$0xff]
  %v225 = vld [vmem:[%s48 + $0x10] sm:$0xff]
  %v226 = vld [vmem:[%s48 + $0x18] sm:$0xff]
  %v227 = vld [vmem:[%s48 + $0x20] sm:$0xff]
  %v228 = vld [vmem:[%s48 + $0x28] sm:$0xff]
  %v229 = vld [vmem:[%s48 + $0x30] sm:$0xff]
  %v230 = vld [vmem:[%s48 + $0x38] sm:$0xff]
  %v231 = vtanh.pop %v223
  %v232 = vtanh.pop %v224
  %v233 = vtanh.pop %v225
  %v234 = vtanh.pop %v226
  %v235 = vtanh.pop %v227
  %v236 = vtanh.pop %v228
  %v237 = vtanh.pop %v229
  %v238 = vtanh.pop %v230
  %v239 = vld [vmem:[%s4] sm:$0xff]
  %v240 = vld [vmem:[%s4 + $0x8] sm:$0xff]
  %v241 = vld [vmem:[%s6] sm:$0x1]
  %v243 = vlaneseq
  %v244 = vshrl.u32 %v243, 7
  %v245 = vsub.s32 0, %v244
  %v246 = vrot.slane %v241, %v245
  %v249 = vsel %vm85, %v231, 0
  %v252 = vsel %vm85, %v232, 0
  %v255 = vsel %vm85, %v233, 0
  %v258 = vsel %vm85, %v234, 0
  %v261 = vsel %vm85, %v235, 0
  %v264 = vsel %vm85, %v236, 0
  %v267 = vsel %vm85, %v237, 0
  %v270 = vsel %vm85, %v238, 0
  %272 = vmatprep.subr.mxu0 0.0
  %273 = vmatpush1.msra.mxu0 %v239
  %274 = vmatprep.subr.mxu0 0.0
  %275 = vmatpush1.msra.mxu0 %v240
  %276 = vmatprep.subr.mxu0 0.0
  %277 = vmatpush1.msra.mxu0 0.0
  %278 = vmatprep.subr.mxu0 0.0
  %279 = vmatpush1.msra.mxu0 0.0
  %280 = vmatprep.subr.mxu0 0.0
  %281 = vmatpush1.msra.mxu0 0.0
  %282 = vmatprep.subr.mxu0 0.0
  %283 = vmatpush1.msra.mxu0 0.0
  %284 = vmatprep.subr.mxu0 0.0
  %285 = vmatpush1.msra.mxu0 0.0
  %286 = vmatprep.subr.mxu0 0.0
  %287 = vmatpush1.msra.mxu0 0.0
  %288 = vmatprep.subr.mxu0 0.0
  %289 = vmatpush1.msra.mxu0 0.0
  %290 = vmatprep.subr.mxu0 0.0
  %291 = vmatpush1.msra.mxu0 0.0
  %292 = vmatprep.subr.mxu0 0.0
  %293 = vmatpush1.msra.mxu0 0.0
  %294 = vmatprep.subr.mxu0 0.0
  %295 = vmatpush1.msra.mxu0 0.0
  %296 = vmatprep.subr.mxu0 0.0
  %297 = vmatpush1.msra.mxu0 0.0
  %298 = vmatprep.subr.mxu0 0.0
  %299 = vmatpush1.msra.mxu0 0.0
  %300 = vmatprep.subr.mxu0 0.0
  %301 = vmatpush1.msra.mxu0 0.0
  %302 = vmatprep.subr.mxu0 0.0
  %303 = vmatpush1.msra.mxu0 0.0
  %304 = vmatprep.subr.mxu0 0.0
  %305 = vmatpush1.msra.mxu0 0.0
  %306 = vmatprep.subr.mxu0 0.0
  %307 = vmatpush1.msra.mxu0 0.0
  %308 = vmatprep.subr.mxu0 0.0
  %309 = vmatpush1.msra.mxu0 0.0
  %310 = vmatprep.subr.mxu0 0.0
  %311 = vmatpush1.msra.mxu0 0.0
  %312 = vmatprep.subr.mxu0 0.0
  %313 = vmatpush1.msra.mxu0 0.0
  %314 = vmatprep.subr.mxu0 0.0
  %315 = vmatpush1.msra.mxu0 0.0
  %316 = vmatprep.subr.mxu0 0.0
  %317 = vmatpush1.msra.mxu0 0.0
  %318 = vmatprep.subr.mxu0 0.0
  %319 = vmatpush1.msra.mxu0 0.0
  %320 = vmatprep.subr.mxu0 0.0
  %321 = vmatpush1.msra.mxu0 0.0
  %322 = vmatprep.subr.mxu0 0.0
  %323 = vmatpush1.msra.mxu0 0.0
  %324 = vmatprep.subr.mxu0 0.0
  %325 = vmatpush1.msra.mxu0 0.0
  %326 = vmatprep.subr.mxu0 0.0
  %327 = vmatpush1.msra.mxu0 0.0
  %328 = vmatprep.subr.mxu0 0.0
  %329 = vmatpush1.msra.mxu0 0.0
  %330 = vmatprep.subr.mxu0 0.0
  %331 = vmatpush1.msra.mxu0 0.0
  %332 = vmatprep.subr.mxu0 0.0
  %333 = vmatpush1.msra.mxu0 0.0
  %334 = vmatprep.subr.mxu0 0.0
  %335 = vmatpush1.msra.mxu0 0.0
  %336 = vmatprep.mubr.f32.mxu0 0.0
  %337 = vmatmul.mubr.f32.gmra.mrb[0].mxu0 %v249
  %v338 = vpop.f32.mrb[0].mxu0
  %v339 = vadd.f32 %v246, %v338
  %v340 = vpop.f32.mrb[0].mxu0
  %341 = vmatprep.mubr.f32.mxu0 0.0
  %342 = vmatmul.mubr.f32.gmra.mrb[0].mxu0 %v252
  %v343 = vpop.f32.mrb[0].mxu0
  %v344 = vadd.f32 %v246, %v343
  %v345 = vpop.f32.mrb[0].mxu0
  %346 = vmatprep.mubr.f32.mxu0 0.0
  %347 = vmatmul.mubr.f32.gmra.mrb[0].mxu0 %v255
  %v348 = vpop.f32.mrb[0].mxu0
  %v349 = vadd.f32 %v246, %v348
  %v350 = vpop.f32.mrb[0].mxu0
  %351 = vmatprep.mubr.f32.mxu0 0.0
  %352 = vmatmul.mubr.f32.gmra.mrb[0].mxu0 %v258
  %v353 = vpop.f32.mrb[0].mxu0
  %v354 = vadd.f32 %v246, %v353
  %v355 = vpop.f32.mrb[0].mxu0
  %356 = vmatprep.mubr.f32.mxu0 0.0
  %357 = vmatmul.mubr.f32.gmra.mrb[0].mxu0 %v261
  %v358 = vpop.f32.mrb[0].mxu0
  %v359 = vadd.f32 %v246, %v358
  %v360 = vpop.f32.mrb[0].mxu0
  %361 = vmatprep.mubr.f32.mxu0 0.0
  %362 = vmatmul.mubr.f32.gmra.mrb[0].mxu0 %v264
  %v363 = vpop.f32.mrb[0].mxu0
  %v364 = vadd.f32 %v246, %v363
  %v365 = vpop.f32.mrb[0].mxu0
  %366 = vmatprep.mubr.f32.mxu0 0.0
  %367 = vmatmul.mubr.f32.gmra.mrb[0].mxu0 %v267
  %v368 = vpop.f32.mrb[0].mxu0
  %v369 = vadd.f32 %v246, %v368
  %v370 = vpop.f32.mrb[0].mxu0
  %371 = vmatprep.mubr.f32.mxu0 0.0
  %372 = vmatmul.mubr.f32.gmra.mrb[0].mxu0 %v270
  %v373 = vpop.f32.mrb[0].mxu0
  %v374 = vadd.f32 %v246, %v373
  %v375 = vpop.f32.mrb[0].mxu0
  %376 = vdwg.mxu0
  %377 = vst [vmem:[#allocation3] sm:$0xff] %v339
  %378 = vst [vmem:[#allocation3 + $0x8] sm:$0xff] %v344
  %379 = vst [vmem:[#allocation3 + $0x10] sm:$0xff] %v349
  %380 = vst [vmem:[#allocation3 + $0x18] sm:$0xff] %v354
  %381 = vst [vmem:[#allocation3 + $0x20] sm:$0xff] %v359
  %382 = vst [vmem:[#allocation3 + $0x28] sm:$0xff] %v364
  %383 = vst [vmem:[#allocation3 + $0x30] sm:$0xff] %v369
  %384 = vst [vmem:[#allocation3 + $0x38] sm:$0xff] %v374
  %v385 = vld [vmem:[%s2] sm:$0xff]
  %v386 = vld [vmem:[%s7] sm:$0xff]
  %v387 = vld [vmem:[%s7 + $0x8] sm:$0xff]
  %v388 = vld [vmem:[%s7 + $0x10] sm:$0xff]
  %v389 = vld [vmem:[%s7 + $0x18] sm:$0xff]
  %v390 = vld [vmem:[%s7 + $0x20] sm:$0xff]
  %v391 = vld [vmem:[%s7 + $0x28] sm:$0xff]
  %v392 = vld [vmem:[%s7 + $0x30] sm:$0xff]
  %v393 = vld [vmem:[%s7 + $0x38] sm:$0xff]
  %v394 = vld [vmem:[%s7 + $0x40] sm:$0xff]
  %v395 = vld [vmem:[%s7 + $0x48] sm:$0xff]
  %v396 = vld [vmem:[%s7 + $0x50] sm:$0xff]
  %v397 = vld [vmem:[%s7 + $0x58] sm:$0xff]
  %v398 = vld [vmem:[%s7 + $0x60] sm:$0xff]
  %v399 = vld [vmem:[%s7 + $0x68] sm:$0xff]
  %v400 = vld [vmem:[%s7 + $0x70] sm:$0xff]
  %v401 = vld [vmem:[%s7 + $0x78] sm:$0xff]
  %s402 = smul.u32 0, 8
  %s403 = ssub.s32 0, 0
  %s404 = smul.u32 %s403, 8
  %v405 = vld [vmem:[#allocation4] sm:$0xff]
  %v406 = vld [vmem:[#allocation5] sm:$0xff]
  %v407 = vld [vmem:[#allocation6] sm:$0xff]
  %v408 = vld [vmem:[#allocation7] sm:$0xff]
  %410 = vrot.lane.b32.xlu0 %v407, 32
  %v411 = vpop.permute.xlu0 %410
  %vm413 = vcmask 261120
  %v414 = vsel %vm413, %v405, %v411
  %vm415 = vcmask 523264
  %v417 = vsel %vm415, %v414, 0
  %419 = vmatprep.subr.mxu0 %v387
  %420 = vmatpush1.msra.mxu0 %v386
  %421 = vmatprep.subr.mxu0 %v389
  %422 = vmatpush1.msra.mxu0 %v388
  %423 = vmatprep.subr.mxu0 %v391
  %424 = vmatpush1.msra.mxu0 %v390
  %425 = vmatprep.subr.mxu0 %v393
  %426 = vmatpush1.msra.mxu0 %v392
  %427 = vmatprep.subr.mxu0 %v395
  %428 = vmatpush1.msra.mxu0 %v394
  %429 = vmatprep.subr.mxu0 %v397
  %430 = vmatpush1.msra.mxu0 %v396
  %431 = vmatprep.subr.mxu0 %v399
  %432 = vmatpush1.msra.mxu0 %v398
  %433 = vmatprep.subr.mxu0 %v401
  %434 = vmatpush1.msra.mxu0 %v400
  %435 = vmatprep.subr.mxu0 0.0
  %436 = vmatpush1.msra.mxu0 0.0
  %437 = vmatprep.subr.mxu0 0.0
  %438 = vmatpush1.msra.mxu0 0.0
  %439 = vmatprep.subr.mxu0 0.0
  %440 = vmatpush1.msra.mxu0 0.0
  %441 = vmatprep.subr.mxu0 0.0
  %442 = vmatpush1.msra.mxu0 0.0
  %443 = vmatprep.subr.mxu0 0.0
  %444 = vmatpush1.msra.mxu0 0.0
  %445 = vmatprep.subr.mxu0 0.0
  %446 = vmatpush1.msra.mxu0 0.0
  %447 = vmatprep.subr.mxu0 0.0
  %448 = vmatpush1.msra.mxu0 0.0
  %449 = vmatprep.subr.mxu0 0.0
  %450 = vmatpush1.msra.mxu0 0.0
  %451 = vmatprep.subr.mxu0 0.0
  %452 = vmatpush1.msra.mxu0 0.0
  %453 = vmatprep.subr.mxu0 0.0
  %454 = vmatpush1.msra.mxu0 0.0
  %455 = vmatprep.subr.mxu0 0.0
  %456 = vmatpush1.msra.mxu0 0.0
  %457 = vmatprep.subr.mxu0 0.0
  %458 = vmatpush1.msra.mxu0 0.0
  %459 = vmatprep.subr.mxu0 0.0
  %460 = vmatpush1.msra.mxu0 0.0
  %461 = vmatprep.subr.mxu0 0.0
  %462 = vmatpush1.msra.mxu0 0.0
  %463 = vmatprep.subr.mxu0 0.0
  %464 = vmatpush1.msra.mxu0 0.0
  %465 = vmatprep.subr.mxu0 0.0
  %466 = vmatpush1.msra.mxu0 0.0
  %467 = vmatprep.subr.mxu0 0.0
  %468 = vmatpush1.msra.mxu0 0.0
  %469 = vmatprep.subr.mxu0 0.0
  %470 = vmatpush1.msra.mxu0 0.0
  %471 = vmatprep.subr.mxu0 0.0
  %472 = vmatpush1.msra.mxu0 0.0
  %473 = vmatprep.subr.mxu0 0.0
  %474 = vmatpush1.msra.mxu0 0.0
  %475 = vmatprep.subr.mxu0 0.0
  %476 = vmatpush1.msra.mxu0 0.0
  %477 = vmatprep.subr.mxu0 0.0
  %478 = vmatpush1.msra.mxu0 0.0
  %479 = vmatprep.subr.mxu0 0.0
  %480 = vmatpush1.msra.mxu0 0.0
  %481 = vmatprep.subr.mxu0 0.0
  %482 = vmatpush1.msra.mxu0 0.0
  %483 = vmatprep.mubr.f32.mxu0 0.0
  %484 = vmatmul.mubr.f32.gmra.mrb[0].mxu0 %v417
  %v485 = vpop.f32.mrb[0].mxu0
  %v486 = vadd.f32 0.0, %v485
  %v487 = vpop.f32.mrb[0].mxu0
  %v488 = vadd.f32 0.0, %v487
  %489 = vdwg.mxu0
  %v490 = vld [vmem:[#allocation2] sm:$0xff]
  %v491 = vadd.f32 %v486, %v490
  %s492 = scalar_lea.vmem [#allocation3], 56
  %v493 = vld [vmem:[%s492] sm:$0xff]
  %v494 = vadd.f32 %v488, %v493
  %v495 = vxor.u32 %v491, 2147483648
  %v496 = vmul.f32 %v495, 1.442695
  %v497 = vpow.pop %v496
  %v498 = vadd.f32 %v497, 1.0
  %v499 = vrcp.pop %v498
  %v500 = vmul.f32 1.0, %v499
  %v501 = vtanh.pop %v491
  %503 = vrot.lane.b32.xlu0 %v406, 32
  %v504 = vpop.permute.xlu0 %503
  %v506 = vmul.f32 %v500, %v504
  %508 = vrot.lane.b32.xlu0 %v501, 32
  %v509 = vpop.permute.xlu0 %508
  %v511 = vmul.f32 %v500, %v509
  %513 = vrot.lane.b32.xlu0 %v511, 32
  %v514 = vpop.permute.xlu0 %513
  %v516 = vadd.f32 %v506, %v514
  %v517 = vtanh.pop %v516
  %519 = vrot.lane.b32.xlu0 %v517, 32
  %v520 = vpop.permute.xlu0 %519
  %v522 = vmul.f32 %v500, %v520
  %v523 = vxor.u32 %v494, 2147483648
  %v524 = vmul.f32 %v523, 1.442695
  %v525 = vpow.pop %v524
  %v526 = vadd.f32 %v525, 1.0
  %v527 = vrcp.pop %v526
  %v528 = vmul.f32 1.0, %v527
  %v529 = vtanh.pop %v494
  %531 = vrot.lane.b32.xlu0 %v408, 32
  %v532 = vpop.permute.xlu0 %531
  %v534 = vmul.f32 %v528, %v532
  %536 = vrot.lane.b32.xlu0 %v529, 32
  %v537 = vpop.permute.xlu0 %536
  %v539 = vmul.f32 %v528, %v537
  %541 = vrot.lane.b32.xlu0 %v539, 32
  %v542 = vpop.permute.xlu0 %541
  %v544 = vadd.f32 %v534, %v542
  %v545 = vtanh.pop %v544
  %547 = vrot.lane.b32.xlu0 %v545, 32
  %v548 = vpop.permute.xlu0 %547
  %v550 = vmul.f32 %v528, %v548
  %v551 = vstv %s402
  %vm552 = vcmp.lt.s32.totalorder %v551, %v385
  %s553 = sadd.s32 %s404, 7
  %v554 = vstv %s553
  %vm555 = vcmp.lt.s32.totalorder %v554, %v385
  %v556 = vsel %vm552, 1, 0
  %557 = vset.pattern.permute.xlu0 0
  %558 = vperm.xlu0 %557, %v556
  %v559 = vpop.permute.xlu0 %558
  %vm560 = vcmp.eq.s32.totalorder %v559, 1
  %562 = vrot.lane.b32.xlu0 %v405, 64
  %v563 = vpop.permute.xlu0 %562
  %v565 = vsel %vm560, %v522, %v563
  %v566 = vsel %vm560, %v516, %v504
  %v567 = vsel %vm555, 1, 0
  %568 = vset.pattern.permute.xlu0 0
  %569 = vperm.xlu0 %568, %v567
  %v570 = vpop.permute.xlu0 %569
  %vm571 = vcmp.eq.s32.totalorder %v570, 1
  %572 = vrot.lane.b32.xlu0 %v407, 64
  %v573 = vpop.permute.xlu0 %572
  %v575 = vsel %vm571, %v550, %v573
  %v576 = vsel %vm571, %v544, %v532
  %578 = vrot.lane.b32.xlu0 %v565, 64
  %v579 = vpop.permute.xlu0 %578
  %582 = vrot.lane.b32.xlu0 %v575, 96
  %v583 = vpop.permute.xlu0 %582
  %v585 = vsel %vm413, %v579, %v583
  %v587 = vsel %vm415, %v585, 0
  %589 = vmatprep.subr.mxu0 %v387
  %590 = vmatpush1.msra.mxu0 %v386
  %591 = vmatprep.subr.mxu0 %v389
  %592 = vmatpush1.msra.mxu0 %v388
  %593 = vmatprep.subr.mxu0 %v391
  %594 = vmatpush1.msra.mxu0 %v390
  %595 = vmatprep.subr.mxu0 %v393
  %596 = vmatpush1.msra.mxu0 %v392
  %597 = vmatprep.subr.mxu0 %v395
  %598 = vmatpush1.msra.mxu0 %v394
  %599 = vmatprep.subr.mxu0 %v397
  %600 = vmatpush1.msra.mxu0 %v396
  %601 = vmatprep.subr.mxu0 %v399
  %602 = vmatpush1.msra.mxu0 %v398
  %603 = vmatprep.subr.mxu0 %v401
  %604 = vmatpush1.msra.mxu0 %v400
  %605 = vmatprep.subr.mxu0 0.0
  %606 = vmatpush1.msra.mxu0 0.0
  %607 = vmatprep.subr.mxu0 0.0
  %608 = vmatpush1.msra.mxu0 0.0
  %609 = vmatprep.subr.mxu0 0.0
  %610 = vmatpush1.msra.mxu0 0.0
  %611 = vmatprep.subr.mxu0 0.0
  %612 = vmatpush1.msra.mxu0 0.0
  %613 = vmatprep.subr.mxu0 0.0
  %614 = vmatpush1.msra.mxu0 0.0
  %615 = vmatprep.subr.mxu0 0.0
  %616 = vmatpush1.msra.mxu0 0.0
  %617 = vmatprep.subr.mxu0 0.0
  %618 = vmatpush1.msra.mxu0 0.0
  %619 = vmatprep.subr.mxu0 0.0
  %620 = vmatpush1.msra.mxu0 0.0
  %621 = vmatprep.subr.mxu0 0.0
  %622 = vmatpush1.msra.mxu0 0.0
  %623 = vmatprep.subr.mxu0 0.0
  %624 = vmatpush1.msra.mxu0 0.0
  %625 = vmatprep.subr.mxu0 0.0
  %626 = vmatpush1.msra.mxu0 0.0
  %627 = vmatprep.subr.mxu0 0.0
  %628 = vmatpush1.msra.mxu0 0.0
  %629 = vmatprep.subr.mxu0 0.0
  %630 = vmatpush1.msra.mxu0 0.0
  %631 = vmatprep.subr.mxu0 0.0
  %632 = vmatpush1.msra.mxu0 0.0
  %633 = vmatprep.subr.mxu0 0.0
  %634 = vmatpush1.msra.mxu0 0.0
  %635 = vmatprep.subr.mxu0 0.0
  %636 = vmatpush1.msra.mxu0 0.0
  %637 = vmatprep.subr.mxu0 0.0
  %638 = vmatpush1.msra.mxu0 0.0
  %639 = vmatprep.subr.mxu0 0.0
  %640 = vmatpush1.msra.mxu0 0.0
  %641 = vmatprep.subr.mxu0 0.0
  %642 = vmatpush1.msra.mxu0 0.0
  %643 = vmatprep.subr.mxu0 0.0
  %644 = vmatpush1.msra.mxu0 0.0
  %645 = vmatprep.subr.mxu0 0.0
  %646 = vmatpush1.msra.mxu0 0.0
  %647 = vmatprep.subr.mxu0 0.0
  %648 = vmatpush1.msra.mxu0 0.0
  %649 = vmatprep.subr.mxu0 0.0
  %650 = vmatpush1.msra.mxu0 0.0
  %651 = vmatprep.subr.mxu0 0.0
  %652 = vmatpush1.msra.mxu0 0.0
  %653 = vmatprep.mubr.f32.mxu0 0.0
  %654 = vmatmul.mubr.f32.gmra.mrb[0].mxu0 %v587
  %v655 = vpop.f32.mrb[0].mxu0
  %v656 = vadd.f32 0.0, %v655
  %v657 = vpop.f32.mrb[0].mxu0
  %v658 = vadd.f32 0.0, %v657
  %659 = vdwg.mxu0
  %s660 = scalar_lea.vmem [#allocation2], 8
  %v661 = vld [vmem:[%s660] sm:$0xff]
  %v662 = vadd.f32 %v656, %v661
  %s663 = scalar_lea.vmem [#allocation3], 48
  %v664 = vld [vmem:[%s663] sm:$0xff]
  %v665 = vadd.f32 %v658, %v664
  %v666 = vxor.u32 %v662, 2147483648
  %v667 = vmul.f32 %v666, 1.442695
  %v668 = vpow.pop %v667
  %v669 = vadd.f32 %v668, 1.0
  %v670 = vrcp.pop %v669
  %v671 = vmul.f32 1.0, %v670
  %v672 = vtanh.pop %v662
  %v673 = vmul.f32 %v671, %v566
  %675 = vrot.lane.b32.xlu0 %v672, 32
  %v676 = vpop.permute.xlu0 %675
  %v678 = vmul.f32 %v671, %v676
  %680 = vrot.lane.b32.xlu0 %v678, 32
  %v681 = vpop.permute.xlu0 %680
  %v683 = vadd.f32 %v673, %v681
  %v684 = vtanh.pop %v683
  %686 = vrot.lane.b32.xlu0 %v684, 32
  %v687 = vpop.permute.xlu0 %686
  %v689 = vmul.f32 %v671, %v687
  %v690 = vxor.u32 %v665, 2147483648
  %v691 = vmul.f32 %v690, 1.442695
  %v692 = vpow.pop %v691
  %v693 = vadd.f32 %v692, 1.0
  %v694 = vrcp.pop %v693
  %v695 = vmul.f32 1.0, %v694
  %v696 = vtanh.pop %v665
  %v697 = vmul.f32 %v695, %v576
  %699 = vrot.lane.b32.xlu0 %v696, 32
  %v700 = vpop.permute.xlu0 %699
  %v702 = vmul.f32 %v695, %v700
  %704 = vrot.lane.b32.xlu0 %v702, 32
  %v705 = vpop.permute.xlu0 %704
  %v707 = vadd.f32 %v697, %v705
  %v708 = vtanh.pop %v707
  %710 = vrot.lane.b32.xlu0 %v708, 32
  %v711 = vpop.permute.xlu0 %710
  %v713 = vmul.f32 %v695, %v711
  %s714 = sadd.s32 %s402, 1
  %v715 = vstv %s714
  %vm716 = vcmp.lt.s32.totalorder %v715, %v385
  %s717 = sadd.s32 %s404, 6
  %v718 = vstv %s717
  %vm719 = vcmp.lt.s32.totalorder %v718, %v385
  %v720 = vsel %vm716, 1, 0
  %721 = vset.pattern.permute.xlu0 0
  %722 = vperm.xlu0 %721, %v720
  %v723 = vpop.permute.xlu0 %722
  %vm724 = vcmp.eq.s32.totalorder %v723, 1
  %v725 = vsel %vm724, %v689, %v565
  %v726 = vsel %vm724, %v683, %v566
  %v727 = vsel %vm719, 1, 0
  %728 = vset.pattern.permute.xlu0 0
  %729 = vperm.xlu0 %728, %v727
  %v730 = vpop.permute.xlu0 %729
  %vm731 = vcmp.eq.s32.totalorder %v730, 1
  %v732 = vsel %vm731, %v713, %v575
  %v733 = vsel %vm731, %v707, %v576
  %735 = vrot.lane.b32.xlu0 %v725, 64
  %v736 = vpop.permute.xlu0 %735
  %739 = vrot.lane.b32.xlu0 %v732, 96
  %v740 = vpop.permute.xlu0 %739
  %v742 = vsel %vm413, %v736, %v740
  %v744 = vsel %vm415, %v742, 0
  %746 = vmatprep.subr.mxu0 %v387
  %747 = vmatpush1.msra.mxu0 %v386
  %748 = vmatprep.subr.mxu0 %v389
  %749 = vmatpush1.msra.mxu0 %v388
  %750 = vmatprep.subr.mxu0 %v391
  %751 = vmatpush1.msra.mxu0 %v390
  %752 = vmatprep.subr.mxu0 %v393
  %753 = vmatpush1.msra.mxu0 %v392
  %754 = vmatprep.subr.mxu0 %v395
  %755 = vmatpush1.msra.mxu0 %v394
  %756 = vmatprep.subr.mxu0 %v397
  %757 = vmatpush1.msra.mxu0 %v396
  %758 = vmatprep.subr.mxu0 %v399
  %759 = vmatpush1.msra.mxu0 %v398
  %760 = vmatprep.subr.mxu0 %v401
  %761 = vmatpush1.msra.mxu0 %v400
  %762 = vmatprep.subr.mxu0 0.0
  %763 = vmatpush1.msra.mxu0 0.0
  %764 = vmatprep.subr.mxu0 0.0
  %765 = vmatpush1.msra.mxu0 0.0
  %766 = vmatprep.subr.mxu0 0.0
  %767 = vmatpush1.msra.mxu0 0.0
  %768 = vmatprep.subr.mxu0 0.0
  %769 = vmatpush1.msra.mxu0 0.0
  %770 = vmatprep.subr.mxu0 0.0
  %771 = vmatpush1.msra.mxu0 0.0
  %772 = vmatprep.subr.mxu0 0.0
  %773 = vmatpush1.msra.mxu0 0.0
  %774 = vmatprep.subr.mxu0 0.0
  %775 = vmatpush1.msra.mxu0 0.0
  %776 = vmatprep.subr.mxu0 0.0
  %777 = vmatpush1.msra.mxu0 0.0
  %778 = vmatprep.subr.mxu0 0.0
  %779 = vmatpush1.msra.mxu0 0.0
  %780 = vmatprep.subr.mxu0 0.0
  %781 = vmatpush1.msra.mxu0 0.0
  %782 = vmatprep.subr.mxu0 0.0
  %783 = vmatpush1.msra.mxu0 0.0
  %784 = vmatprep.subr.mxu0 0.0
  %785 = vmatpush1.msra.mxu0 0.0
  %786 = vmatprep.subr.mxu0 0.0
  %787 = vmatpush1.msra.mxu0 0.0
  %788 = vmatprep.subr.mxu0 0.0
  %789 = vmatpush1.msra.mxu0 0.0
  %790 = vmatprep.subr.mxu0 0.0
  %791 = vmatpush1.msra.mxu0 0.0
  %792 = vmatprep.subr.mxu0 0.0
  %793 = vmatpush1.msra.mxu0 0.0
  %794 = vmatprep.subr.mxu0 0.0
  %795 = vmatpush1.msra.mxu0 0.0
  %796 = vmatprep.subr.mxu0 0.0
  %797 = vmatpush1.msra.mxu0 0.0
  %798 = vmatprep.subr.mxu0 0.0
  %799 = vmatpush1.msra.mxu0 0.0
  %800 = vmatprep.subr.mxu0 0.0
  %801 = vmatpush1.msra.mxu0 0.0
  %802 = vmatprep.subr.mxu0 0.0
  %803 = vmatpush1.msra.mxu0 0.0
  %804 = vmatprep.subr.mxu0 0.0
  %805 = vmatpush1.msra.mxu0 0.0
  %806 = vmatprep.subr.mxu0 0.0
  %807 = vmatpush1.msra.mxu0 0.0
  %808 = vmatprep.subr.mxu0 0.0
  %809 = vmatpush1.msra.mxu0 0.0
  %810 = vmatprep.mubr.f32.mxu0 0.0
  %811 = vmatmul.mubr.f32.gmra.mrb[0].mxu0 %v744
  %v812 = vpop.f32.mrb[0].mxu0
  %v813 = vadd.f32 0.0, %v812
  %v814 = vpop.f32.mrb[0].mxu0
  %v815 = vadd.f32 0.0, %v814
  %816 = vdwg.mxu0
  %s817 = scalar_lea.vmem [#allocation2], 16
  %v818 = vld [vmem:[%s817] sm:$0xff]
  %v819 = vadd.f32 %v813, %v818
  %s820 = scalar_lea.vmem [#allocation3], 40
  %v821 = vld [vmem:[%s820] sm:$0xff]
  %v822 = vadd.f32 %v815, %v821
  %v823 = vxor.u32 %v819, 2147483648
  %v824 = vmul.f32 %v823, 1.442695
  %v825 = vpow.pop %v824
  %v826 = vadd.f32 %v825, 1.0
  %v827 = vrcp.pop %v826
  %v828 = vmul.f32 1.0, %v827
  %v829 = vtanh.pop %v819
  %v830 = vmul.f32 %v828, %v726
  %832 = vrot.lane.b32.xlu0 %v829, 32
  %v833 = vpop.permute.xlu0 %832
  %v835 = vmul.f32 %v828, %v833
  %837 = vrot.lane.b32.xlu0 %v835, 32
  %v838 = vpop.permute.xlu0 %837
  %v840 = vadd.f32 %v830, %v838
  %v841 = vtanh.pop %v840
  %843 = vrot.lane.b32.xlu0 %v841, 32
  %v844 = vpop.permute.xlu0 %843
  %v846 = vmul.f32 %v828, %v844
  %v847 = vxor.u32 %v822, 2147483648
  %v848 = vmul.f32 %v847, 1.442695
  %v849 = vpow.pop %v848
  %v850 = vadd.f32 %v849, 1.0
  %v851 = vrcp.pop %v850
  %v852 = vmul.f32 1.0, %v851
  %v853 = vtanh.pop %v822
  %v854 = vmul.f32 %v852, %v733
  %856 = vrot.lane.b32.xlu0 %v853, 32
  %v857 = vpop.permute.xlu0 %856
  %v859 = vmul.f32 %v852, %v857
  %861 = vrot.lane.b32.xlu0 %v859, 32
  %v862 = vpop.permute.xlu0 %861
  %v864 = vadd.f32 %v854, %v862
  %v865 = vtanh.pop %v864
  %867 = vrot.lane.b32.xlu0 %v865, 32
  %v868 = vpop.permute.xlu0 %867
  %v870 = vmul.f32 %v852, %v868
  %s871 = sadd.s32 %s402, 2
  %v872 = vstv %s871
  %vm873 = vcmp.lt.s32.totalorder %v872, %v385
  %s874 = sadd.s32 %s404, 5
  %v875 = vstv %s874
  %vm876 = vcmp.lt.s32.totalorder %v875, %v385
  %v877 = vsel %vm873, 1, 0
  %878 = vset.pattern.permute.xlu0 0
  %879 = vperm.xlu0 %878, %v877
  %v880 = vpop.permute.xlu0 %879
  %vm881 = vcmp.eq.s32.totalorder %v880, 1
  %v882 = vsel %vm881, %v846, %v725
  %v883 = vsel %vm881, %v840, %v726
  %v884 = vsel %vm876, 1, 0
  %885 = vset.pattern.permute.xlu0 0
  %886 = vperm.xlu0 %885, %v884
  %v887 = vpop.permute.xlu0 %886
  %vm888 = vcmp.eq.s32.totalorder %v887, 1
  %v889 = vsel %vm888, %v870, %v732
  %v890 = vsel %vm888, %v864, %v733
  %892 = vrot.lane.b32.xlu0 %v882, 64
  %v893 = vpop.permute.xlu0 %892
  %896 = vrot.lane.b32.xlu0 %v889, 96
  %v897 = vpop.permute.xlu0 %896
  %v899 = vsel %vm413, %v893, %v897
  %v901 = vsel %vm415, %v899, 0
  %903 = vmatprep.subr.mxu0 %v387
  %904 = vmatpush1.msra.mxu0 %v386
  %905 = vmatprep.subr.mxu0 %v389
  %906 = vmatpush1.msra.mxu0 %v388
  %907 = vmatprep.subr.mxu0 %v391
  %908 = vmatpush1.msra.mxu0 %v390
  %909 = vmatprep.subr.mxu0 %v393
  %910 = vmatpush1.msra.mxu0 %v392
  %911 = vmatprep.subr.mxu0 %v395
  %912 = vmatpush1.msra.mxu0 %v394
  %913 = vmatprep.subr.mxu0 %v397
  %914 = vmatpush1.msra.mxu0 %v396
  %915 = vmatprep.subr.mxu0 %v399
  %916 = vmatpush1.msra.mxu0 %v398
  %917 = vmatprep.subr.mxu0 %v401
  %918 = vmatpush1.msra.mxu0 %v400
  %919 = vmatprep.subr.mxu0 0.0
  %920 = vmatpush1.msra.mxu0 0.0
  %921 = vmatprep.subr.mxu0 0.0
  %922 = vmatpush1.msra.mxu0 0.0
  %923 = vmatprep.subr.mxu0 0.0
  %924 = vmatpush1.msra.mxu0 0.0
  %925 = vmatprep.subr.mxu0 0.0
  %926 = vmatpush1.msra.mxu0 0.0
  %927 = vmatprep.subr.mxu0 0.0
  %928 = vmatpush1.msra.mxu0 0.0
  %929 = vmatprep.subr.mxu0 0.0
  %930 = vmatpush1.msra.mxu0 0.0
  %931 = vmatprep.subr.mxu0 0.0
  %932 = vmatpush1.msra.mxu0 0.0
  %933 = vmatprep.subr.mxu0 0.0
  %934 = vmatpush1.msra.mxu0 0.0
  %935 = vmatprep.subr.mxu0 0.0
  %936 = vmatpush1.msra.mxu0 0.0
  %937 = vmatprep.subr.mxu0 0.0
  %938 = vmatpush1.msra.mxu0 0.0
  %939 = vmatprep.subr.mxu0 0.0
  %940 = vmatpush1.msra.mxu0 0.0
  %941 = vmatprep.subr.mxu0 0.0
  %942 = vmatpush1.msra.mxu0 0.0
  %943 = vmatprep.subr.mxu0 0.0
  %944 = vmatpush1.msra.mxu0 0.0
  %945 = vmatprep.subr.mxu0 0.0
  %946 = vmatpush1.msra.mxu0 0.0
  %947 = vmatprep.subr.mxu0 0.0
  %948 = vmatpush1.msra.mxu0 0.0
  %949 = vmatprep.subr.mxu0 0.0
  %950 = vmatpush1.msra.mxu0 0.0
  %951 = vmatprep.subr.mxu0 0.0
  %952 = vmatpush1.msra.mxu0 0.0
  %953 = vmatprep.subr.mxu0 0.0
  %954 = vmatpush1.msra.mxu0 0.0
  %955 = vmatprep.subr.mxu0 0.0
  %956 = vmatpush1.msra.mxu0 0.0
  %957 = vmatprep.subr.mxu0 0.0
  %958 = vmatpush1.msra.mxu0 0.0
  %959 = vmatprep.subr.mxu0 0.0
  %960 = vmatpush1.msra.mxu0 0.0
  %961 = vmatprep.subr.mxu0 0.0
  %962 = vmatpush1.msra.mxu0 0.0
  %963 = vmatprep.subr.mxu0 0.0
  %964 = vmatpush1.msra.mxu0 0.0
  %965 = vmatprep.subr.mxu0 0.0
  %966 = vmatpush1.msra.mxu0 0.0
  %967 = vmatprep.mubr.f32.mxu0 0.0
  %968 = vmatmul.mubr.f32.gmra.mrb[0].mxu0 %v901
  %v969 = vpop.f32.mrb[0].mxu0
  %v970 = vadd.f32 0.0, %v969
  %v971 = vpop.f32.mrb[0].mxu0
  %v972 = vadd.f32 0.0, %v971
  %973 = vdwg.mxu0
  %s974 = scalar_lea.vmem [#allocation2], 24
  %v975 = vld [vmem:[%s974] sm:$0xff]
  %v976 = vadd.f32 %v970, %v975
  %s977 = scalar_lea.vmem [#allocation3], 32
  %v978 = vld [vmem:[%s977] sm:$0xff]
  %v979 = vadd.f32 %v972, %v978
  %v980 = vxor.u32 %v976, 2147483648
  %v981 = vmul.f32 %v980, 1.442695
  %v982 = vpow.pop %v981
  %v983 = vadd.f32 %v982, 1.0
  %v984 = vrcp.pop %v983
  %v985 = vmul.f32 1.0, %v984
  %v986 = vtanh.pop %v976
  %v987 = vmul.f32 %v985, %v883
  %989 = vrot.lane.b32.xlu0 %v986, 32
  %v990 = vpop.permute.xlu0 %989
  %v992 = vmul.f32 %v985, %v990
  %994 = vrot.lane.b32.xlu0 %v992, 32
  %v995 = vpop.permute.xlu0 %994
  %v997 = vadd.f32 %v987, %v995
  %v998 = vtanh.pop %v997
  %1000 = vrot.lane.b32.xlu0 %v998, 32
  %v1001 = vpop.permute.xlu0 %1000
  %v1003 = vmul.f32 %v985, %v1001
  %v1004 = vxor.u32 %v979, 2147483648
  %v1005 = vmul.f32 %v1004, 1.442695
  %v1006 = vpow.pop %v1005
  %v1007 = vadd.f32 %v1006, 1.0
  %v1008 = vrcp.pop %v1007
  %v1009 = vmul.f32 1.0, %v1008
  %v1010 = vtanh.pop %v979
  %v1011 = vmul.f32 %v1009, %v890
  %1013 = vrot.lane.b32.xlu0 %v1010, 32
  %v1014 = vpop.permute.xlu0 %1013
  %v1016 = vmul.f32 %v1009, %v1014
  %1018 = vrot.lane.b32.xlu0 %v1016, 32
  %v1019 = vpop.permute.xlu0 %1018
  %v1021 = vadd.f32 %v1011, %v1019
  %v1022 = vtanh.pop %v1021
  %1024 = vrot.lane.b32.xlu0 %v1022, 32
  %v1025 = vpop.permute.xlu0 %1024
  %v1027 = vmul.f32 %v1009, %v1025
  %s1028 = sadd.s32 %s402, 3
  %v1029 = vstv %s1028
  %vm1030 = vcmp.lt.s32.totalorder %v1029, %v385
  %s1031 = sadd.s32 %s404, 4
  %v1032 = vstv %s1031
  %vm1033 = vcmp.lt.s32.totalorder %v1032, %v385
  %v1034 = vsel %vm1030, 1, 0
  %1035 = vset.pattern.permute.xlu0 0
  %1036 = vperm.xlu0 %1035, %v1034
  %v1037 = vpop.permute.xlu0 %1036
  %vm1038 = vcmp.eq.s32.totalorder %v1037, 1
  %v1039 = vsel %vm1038, %v1003, %v882
  %v1040 = vsel %vm1038, %v997, %v883
  %v1041 = vsel %vm1033, 1, 0
  %1042 = vset.pattern.permute.xlu0 0
  %1043 = vperm.xlu0 %1042, %v1041
  %v1044 = vpop.permute.xlu0 %1043
  %vm1045 = vcmp.eq.s32.totalorder %v1044, 1
  %v1046 = vsel %vm1045, %v1027, %v889
  %v1047 = vsel %vm1045, %v1021, %v890
  %1049 = vrot.lane.b32.xlu0 %v1039, 64
  %v1050 = vpop.permute.xlu0 %1049
  %1053 = vrot.lane.b32.xlu0 %v1046, 96
  %v1054 = vpop.permute.xlu0 %1053
  %v1056 = vsel %vm413, %v1050, %v1054
  %v1058 = vsel %vm415, %v1056, 0
  %1060 = vmatprep.subr.mxu0 %v387
  %1061 = vmatpush1.msra.mxu0 %v386
  %1062 = vmatprep.subr.mxu0 %v389
  %1063 = vmatpush1.msra.mxu0 %v388
  %1064 = vmatprep.subr.mxu0 %v391
  %1065 = vmatpush1.msra.mxu0 %v390
  %1066 = vmatprep.subr.mxu0 %v393
  %1067 = vmatpush1.msra.mxu0 %v392
  %1068 = vmatprep.subr.mxu0 %v395
  %1069 = vmatpush1.msra.mxu0 %v394
  %1070 = vmatprep.subr.mxu0 %v397
  %1071 = vmatpush1.msra.mxu0 %v396
  %1072 = vmatprep.subr.mxu0 %v399
  %1073 = vmatpush1.msra.mxu0 %v398
  %1074 = vmatprep.subr.mxu0 %v401
  %1075 = vmatpush1.msra.mxu0 %v400
  %1076 = vmatprep.subr.mxu0 0.0
  %1077 = vmatpush1.msra.mxu0 0.0
  %1078 = vmatprep.subr.mxu0 0.0
  %1079 = vmatpush1.msra.mxu0 0.0
  %1080 = vmatprep.subr.mxu0 0.0
  %1081 = vmatpush1.msra.mxu0 0.0
  %1082 = vmatprep.subr.mxu0 0.0
  %1083 = vmatpush1.msra.mxu0 0.0
  %1084 = vmatprep.subr.mxu0 0.0
  %1085 = vmatpush1.msra.mxu0 0.0
  %1086 = vmatprep.subr.mxu0 0.0
  %1087 = vmatpush1.msra.mxu0 0.0
  %1088 = vmatprep.subr.mxu0 0.0
  %1089 = vmatpush1.msra.mxu0 0.0
  %1090 = vmatprep.subr.mxu0 0.0
  %1091 = vmatpush1.msra.mxu0 0.0
  %1092 = vmatprep.subr.mxu0 0.0
  %1093 = vmatpush1.msra.mxu0 0.0
  %1094 = vmatprep.subr.mxu0 0.0
  %1095 = vmatpush1.msra.mxu0 0.0
  %1096 = vmatprep.subr.mxu0 0.0
  %1097 = vmatpush1.msra.mxu0 0.0
  %1098 = vmatprep.subr.mxu0 0.0
  %1099 = vmatpush1.msra.mxu0 0.0
  %1100 = vmatprep.subr.mxu0 0.0
  %1101 = vmatpush1.msra.mxu0 0.0
  %1102 = vmatprep.subr.mxu0 0.0
  %1103 = vmatpush1.msra.mxu0 0.0
  %1104 = vmatprep.subr.mxu0 0.0
  %1105 = vmatpush1.msra.mxu0 0.0
  %1106 = vmatprep.subr.mxu0 0.0
  %1107 = vmatpush1.msra.mxu0 0.0
  %1108 = vmatprep.subr.mxu0 0.0
  %1109 = vmatpush1.msra.mxu0 0.0
  %1110 = vmatprep.subr.mxu0 0.0
  %1111 = vmatpush1.msra.mxu0 0.0
  %1112 = vmatprep.subr.mxu0 0.0
  %1113 = vmatpush1.msra.mxu0 0.0
  %1114 = vmatprep.subr.mxu0 0.0
  %1115 = vmatpush1.msra.mxu0 0.0
  %1116 = vmatprep.subr.mxu0 0.0
  %1117 = vmatpush1.msra.mxu0 0.0
  %1118 = vmatprep.subr.mxu0 0.0
  %1119 = vmatpush1.msra.mxu0 0.0
  %1120 = vmatprep.subr.mxu0 0.0
  %1121 = vmatpush1.msra.mxu0 0.0
  %1122 = vmatprep.subr.mxu0 0.0
  %1123 = vmatpush1.msra.mxu0 0.0
  %1124 = vmatprep.mubr.f32.mxu0 0.0
  %1125 = vmatmul.mubr.f32.gmra.mrb[0].mxu0 %v1058
  %v1126 = vpop.f32.mrb[0].mxu0
  %v1127 = vadd.f32 0.0, %v1126
  %v1128 = vpop.f32.mrb[0].mxu0
  %v1129 = vadd.f32 0.0, %v1128
  %1130 = vdwg.mxu0
  %s1131 = scalar_lea.vmem [#allocation2], 32
  %v1132 = vld [vmem:[%s1131] sm:$0xff]
  %v1133 = vadd.f32 %v1127, %v1132
  %s1134 = scalar_lea.vmem [#allocation3], 24
  %v1135 = vld [vmem:[%s1134] sm:$0xff]
  %v1136 = vadd.f32 %v1129, %v1135
  %v1137 = vxor.u32 %v1133, 2147483648
  %v1138 = vmul.f32 %v1137, 1.442695
  %v1139 = vpow.pop %v1138
  %v1140 = vadd.f32 %v1139, 1.0
  %v1141 = vrcp.pop %v1140
  %v1142 = vmul.f32 1.0, %v1141
  %v1143 = vtanh.pop %v1133
  %v1144 = vmul.f32 %v1142, %v1040
  %1146 = vrot.lane.b32.xlu0 %v1143, 32
  %v1147 = vpop.permute.xlu0 %1146
  %v1149 = vmul.f32 %v1142, %v1147
  %1151 = vrot.lane.b32.xlu0 %v1149, 32
  %v1152 = vpop.permute.xlu0 %1151
  %v1154 = vadd.f32 %v1144, %v1152
  %v1155 = vtanh.pop %v1154
  %1157 = vrot.lane.b32.xlu0 %v1155, 32
  %v1158 = vpop.permute.xlu0 %1157
  %v1160 = vmul.f32 %v1142, %v1158
  %v1161 = vxor.u32 %v1136, 2147483648
  %v1162 = vmul.f32 %v1161, 1.442695
  %v1163 = vpow.pop %v1162
  %v1164 = vadd.f32 %v1163, 1.0
  %v1165 = vrcp.pop %v1164
  %v1166 = vmul.f32 1.0, %v1165
  %v1167 = vtanh.pop %v1136
  %v1168 = vmul.f32 %v1166, %v1047
  %1170 = vrot.lane.b32.xlu0 %v1167, 32
  %v1171 = vpop.permute.xlu0 %1170
  %v1173 = vmul.f32 %v1166, %v1171
  %1175 = vrot.lane.b32.xlu0 %v1173, 32
  %v1176 = vpop.permute.xlu0 %1175
  %v1178 = vadd.f32 %v1168, %v1176
  %v1179 = vtanh.pop %v1178
  %1181 = vrot.lane.b32.xlu0 %v1179, 32
  %v1182 = vpop.permute.xlu0 %1181
  %v1184 = vmul.f32 %v1166, %v1182
  %s1185 = sadd.s32 %s402, 4
  %v1186 = vstv %s1185
  %vm1187 = vcmp.lt.s32.totalorder %v1186, %v385
  %s1188 = sadd.s32 %s404, 3
  %v1189 = vstv %s1188
  %vm1190 = vcmp.lt.s32.totalorder %v1189, %v385
  %v1191 = vsel %vm1187, 1, 0
  %1192 = vset.pattern.permute.xlu0 0
  %1193 = vperm.xlu0 %1192, %v1191
  %v1194 = vpop.permute.xlu0 %1193
  %vm1195 = vcmp.eq.s32.totalorder %v1194, 1
  %v1196 = vsel %vm1195, %v1160, %v1039
  %v1197 = vsel %vm1195, %v1154, %v1040
  %v1198 = vsel %vm1190, 1, 0
  %1199 = vset.pattern.permute.xlu0 0
  %1200 = vperm.xlu0 %1199, %v1198
  %v1201 = vpop.permute.xlu0 %1200
  %vm1202 = vcmp.eq.s32.totalorder %v1201, 1
  %v1203 = vsel %vm1202, %v1184, %v1046
  %v1204 = vsel %vm1202, %v1178, %v1047
  %1206 = vrot.lane.b32.xlu0 %v1196, 64
  %v1207 = vpop.permute.xlu0 %1206
  %1210 = vrot.lane.b32.xlu0 %v1203, 96
  %v1211 = vpop.permute.xlu0 %1210
  %v1213 = vsel %vm413, %v1207, %v1211
  %v1215 = vsel %vm415, %v1213, 0
  %1217 = vmatprep.subr.mxu0 %v387
  %1218 = vmatpush1.msra.mxu0 %v386
  %1219 = vmatprep.subr.mxu0 %v389
  %1220 = vmatpush1.msra.mxu0 %v388
  %1221 = vmatprep.subr.mxu0 %v391
  %1222 = vmatpush1.msra.mxu0 %v390
  %1223 = vmatprep.subr.mxu0 %v393
  %1224 = vmatpush1.msra.mxu0 %v392
  %1225 = vmatprep.subr.mxu0 %v395
  %1226 = vmatpush1.msra.mxu0 %v394
  %1227 = vmatprep.subr.mxu0 %v397
  %1228 = vmatpush1.msra.mxu0 %v396
  %1229 = vmatprep.subr.mxu0 %v399
  %1230 = vmatpush1.msra.mxu0 %v398
  %1231 = vmatprep.subr.mxu0 %v401
  %1232 = vmatpush1.msra.mxu0 %v400
  %1233 = vmatprep.subr.mxu0 0.0
  %1234 = vmatpush1.msra.mxu0 0.0
  %1235 = vmatprep.subr.mxu0 0.0
  %1236 = vmatpush1.msra.mxu0 0.0
  %1237 = vmatprep.subr.mxu0 0.0
  %1238 = vmatpush1.msra.mxu0 0.0
  %1239 = vmatprep.subr.mxu0 0.0
  %1240 = vmatpush1.msra.mxu0 0.0
  %1241 = vmatprep.subr.mxu0 0.0
  %1242 = vmatpush1.msra.mxu0 0.0
  %1243 = vmatprep.subr.mxu0 0.0
  %1244 = vmatpush1.msra.mxu0 0.0
  %1245 = vmatprep.subr.mxu0 0.0
  %1246 = vmatpush1.msra.mxu0 0.0
  %1247 = vmatprep.subr.mxu0 0.0
  %1248 = vmatpush1.msra.mxu0 0.0
  %1249 = vmatprep.subr.mxu0 0.0
  %1250 = vmatpush1.msra.mxu0 0.0
  %1251 = vmatprep.subr.mxu0 0.0
  %1252 = vmatpush1.msra.mxu0 0.0
  %1253 = vmatprep.subr.mxu0 0.0
  %1254 = vmatpush1.msra.mxu0 0.0
  %1255 = vmatprep.subr.mxu0 0.0
  %1256 = vmatpush1.msra.mxu0 0.0
  %1257 = vmatprep.subr.mxu0 0.0
  %1258 = vmatpush1.msra.mxu0 0.0
  %1259 = vmatprep.subr.mxu0 0.0
  %1260 = vmatpush1.msra.mxu0 0.0
  %1261 = vmatprep.subr.mxu0 0.0
  %1262 = vmatpush1.msra.mxu0 0.0
  %1263 = vmatprep.subr.mxu0 0.0
  %1264 = vmatpush1.msra.mxu0 0.0
  %1265 = vmatprep.subr.mxu0 0.0
  %1266 = vmatpush1.msra.mxu0 0.0
  %1267 = vmatprep.subr.mxu0 0.0
  %1268 = vmatpush1.msra.mxu0 0.0
  %1269 = vmatprep.subr.mxu0 0.0
  %1270 = vmatpush1.msra.mxu0 0.0
  %1271 = vmatprep.subr.mxu0 0.0
  %1272 = vmatpush1.msra.mxu0 0.0
  %1273 = vmatprep.subr.mxu0 0.0
  %1274 = vmatpush1.msra.mxu0 0.0
  %1275 = vmatprep.subr.mxu0 0.0
  %1276 = vmatpush1.msra.mxu0 0.0
  %1277 = vmatprep.subr.mxu0 0.0
  %1278 = vmatpush1.msra.mxu0 0.0
  %1279 = vmatprep.subr.mxu0 0.0
  %1280 = vmatpush1.msra.mxu0 0.0
  %1281 = vmatprep.mubr.f32.mxu0 0.0
  %1282 = vmatmul.mubr.f32.gmra.mrb[0].mxu0 %v1215
  %v1283 = vpop.f32.mrb[0].mxu0
  %v1284 = vadd.f32 0.0, %v1283
  %v1285 = vpop.f32.mrb[0].mxu0
  %v1286 = vadd.f32 0.0, %v1285
  %1287 = vdwg.mxu0
  %s1288 = scalar_lea.vmem [#allocation2], 40
  %v1289 = vld [vmem:[%s1288] sm:$0xff]
  %v1290 = vadd.f32 %v1284, %v1289
  %s1291 = scalar_lea.vmem [#allocation3], 16
  %v1292 = vld [vmem:[%s1291] sm:$0xff]
  %v1293 = vadd.f32 %v1286, %v1292
  %v1294 = vxor.u32 %v1290, 2147483648
  %v1295 = vmul.f32 %v1294, 1.442695
  %v1296 = vpow.pop %v1295
  %v1297 = vadd.f32 %v1296, 1.0
  %v1298 = vrcp.pop %v1297
  %v1299 = vmul.f32 1.0, %v1298
  %v1300 = vtanh.pop %v1290
  %v1301 = vmul.f32 %v1299, %v1197
  %1303 = vrot.lane.b32.xlu0 %v1300, 32
  %v1304 = vpop.permute.xlu0 %1303
  %v1306 = vmul.f32 %v1299, %v1304
  %1308 = vrot.lane.b32.xlu0 %v1306, 32
  %v1309 = vpop.permute.xlu0 %1308
  %v1311 = vadd.f32 %v1301, %v1309
  %v1312 = vtanh.pop %v1311
  %1314 = vrot.lane.b32.xlu0 %v1312, 32
  %v1315 = vpop.permute.xlu0 %1314
  %v1317 = vmul.f32 %v1299, %v1315
  %v1318 = vxor.u32 %v1293, 2147483648
  %v1319 = vmul.f32 %v1318, 1.442695
  %v1320 = vpow.pop %v1319
  %v1321 = vadd.f32 %v1320, 1.0
  %v1322 = vrcp.pop %v1321
  %v1323 = vmul.f32 1.0, %v1322
  %v1324 = vtanh.pop %v1293
  %v1325 = vmul.f32 %v1323, %v1204
  %1327 = vrot.lane.b32.xlu0 %v1324, 32
  %v1328 = vpop.permute.xlu0 %1327
  %v1330 = vmul.f32 %v1323, %v1328
  %1332 = vrot.lane.b32.xlu0 %v1330, 32
  %v1333 = vpop.permute.xlu0 %1332
  %v1335 = vadd.f32 %v1325, %v1333
  %v1336 = vtanh.pop %v1335
  %1338 = vrot.lane.b32.xlu0 %v1336, 32
  %v1339 = vpop.permute.xlu0 %1338
  %v1341 = vmul.f32 %v1323, %v1339
  %s1342 = sadd.s32 %s402, 5
  %v1343 = vstv %s1342
  %vm1344 = vcmp.lt.s32.totalorder %v1343, %v385
  %s1345 = sadd.s32 %s404, 2
  %v1346 = vstv %s1345
  %vm1347 = vcmp.lt.s32.totalorder %v1346, %v385
  %v1348 = vsel %vm1344, 1, 0
  %1349 = vset.pattern.permute.xlu0 0
  %1350 = vperm.xlu0 %1349, %v1348
  %v1351 = vpop.permute.xlu0 %1350
  %vm1352 = vcmp.eq.s32.totalorder %v1351, 1
  %v1353 = vsel %vm1352, %v1317, %v1196
  %v1354 = vsel %vm1352, %v1311, %v1197
  %v1355 = vsel %vm1347, 1, 0
  %1356 = vset.pattern.permute.xlu0 0
  %1357 = vperm.xlu0 %1356, %v1355
  %v1358 = vpop.permute.xlu0 %1357
  %vm1359 = vcmp.eq.s32.totalorder %v1358, 1
  %v1360 = vsel %vm1359, %v1341, %v1203
  %v1361 = vsel %vm1359, %v1335, %v1204
  %1363 = vrot.lane.b32.xlu0 %v1353, 64
  %v1364 = vpop.permute.xlu0 %1363
  %1367 = vrot.lane.b32.xlu0 %v1360, 96
  %v1368 = vpop.permute.xlu0 %1367
  %v1370 = vsel %vm413, %v1364, %v1368
  %v1372 = vsel %vm415, %v1370, 0
  %1374 = vmatprep.subr.mxu0 %v387
  %1375 = vmatpush1.msra.mxu0 %v386
  %1376 = vmatprep.subr.mxu0 %v389
  %1377 = vmatpush1.msra.mxu0 %v388
  %1378 = vmatprep.subr.mxu0 %v391
  %1379 = vmatpush1.msra.mxu0 %v390
  %1380 = vmatprep.subr.mxu0 %v393
  %1381 = vmatpush1.msra.mxu0 %v392
  %1382 = vmatprep.subr.mxu0 %v395
  %1383 = vmatpush1.msra.mxu0 %v394
  %1384 = vmatprep.subr.mxu0 %v397
  %1385 = vmatpush1.msra.mxu0 %v396
  %1386 = vmatprep.subr.mxu0 %v399
  %1387 = vmatpush1.msra.mxu0 %v398
  %1388 = vmatprep.subr.mxu0 %v401
  %1389 = vmatpush1.msra.mxu0 %v400
  %1390 = vmatprep.subr.mxu0 0.0
  %1391 = vmatpush1.msra.mxu0 0.0
  %1392 = vmatprep.subr.mxu0 0.0
  %1393 = vmatpush1.msra.mxu0 0.0
  %1394 = vmatprep.subr.mxu0 0.0
  %1395 = vmatpush1.msra.mxu0 0.0
  %1396 = vmatprep.subr.mxu0 0.0
  %1397 = vmatpush1.msra.mxu0 0.0
  %1398 = vmatprep.subr.mxu0 0.0
  %1399 = vmatpush1.msra.mxu0 0.0
  %1400 = vmatprep.subr.mxu0 0.0
  %1401 = vmatpush1.msra.mxu0 0.0
  %1402 = vmatprep.subr.mxu0 0.0
  %1403 = vmatpush1.msra.mxu0 0.0
  %1404 = vmatprep.subr.mxu0 0.0
  %1405 = vmatpush1.msra.mxu0 0.0
  %1406 = vmatprep.subr.mxu0 0.0
  %1407 = vmatpush1.msra.mxu0 0.0
  %1408 = vmatprep.subr.mxu0 0.0
  %1409 = vmatpush1.msra.mxu0 0.0
  %1410 = vmatprep.subr.mxu0 0.0
  %1411 = vmatpush1.msra.mxu0 0.0
  %1412 = vmatprep.subr.mxu0 0.0
  %1413 = vmatpush1.msra.mxu0 0.0
  %1414 = vmatprep.subr.mxu0 0.0
  %1415 = vmatpush1.msra.mxu0 0.0
  %1416 = vmatprep.subr.mxu0 0.0
  %1417 = vmatpush1.msra.mxu0 0.0
  %1418 = vmatprep.subr.mxu0 0.0
  %1419 = vmatpush1.msra.mxu0 0.0
  %1420 = vmatprep.subr.mxu0 0.0
  %1421 = vmatpush1.msra.mxu0 0.0
  %1422 = vmatprep.subr.mxu0 0.0
  %1423 = vmatpush1.msra.mxu0 0.0
  %1424 = vmatprep.subr.mxu0 0.0
  %1425 = vmatpush1.msra.mxu0 0.0
  %1426 = vmatprep.subr.mxu0 0.0
  %1427 = vmatpush1.msra.mxu0 0.0
  %1428 = vmatprep.subr.mxu0 0.0
  %1429 = vmatpush1.msra.mxu0 0.0
  %1430 = vmatprep.subr.mxu0 0.0
  %1431 = vmatpush1.msra.mxu0 0.0
  %1432 = vmatprep.subr.mxu0 0.0
  %1433 = vmatpush1.msra.mxu0 0.0
  %1434 = vmatprep.subr.mxu0 0.0
  %1435 = vmatpush1.msra.mxu0 0.0
  %1436 = vmatprep.subr.mxu0 0.0
  %1437 = vmatpush1.msra.mxu0 0.0
  %1438 = vmatprep.mubr.f32.mxu0 0.0
  %1439 = vmatmul.mubr.f32.gmra.mrb[0].mxu0 %v1372
  %v1440 = vpop.f32.mrb[0].mxu0
  %v1441 = vadd.f32 0.0, %v1440
  %v1442 = vpop.f32.mrb[0].mxu0
  %v1443 = vadd.f32 0.0, %v1442
  %1444 = vdwg.mxu0
  %s1445 = scalar_lea.vmem [#allocation2], 48
  %v1446 = vld [vmem:[%s1445] sm:$0xff]
  %v1447 = vadd.f32 %v1441, %v1446
  %s1448 = scalar_lea.vmem [#allocation3], 8
  %v1449 = vld [vmem:[%s1448] sm:$0xff]
  %v1450 = vadd.f32 %v1443, %v1449
  %v1451 = vxor.u32 %v1447, 2147483648
  %v1452 = vmul.f32 %v1451, 1.442695
  %v1453 = vpow.pop %v1452
  %v1454 = vadd.f32 %v1453, 1.0
  %v1455 = vrcp.pop %v1454
  %v1456 = vmul.f32 1.0, %v1455
  %v1457 = vtanh.pop %v1447
  %v1458 = vmul.f32 %v1456, %v1354
  %1460 = vrot.lane.b32.xlu0 %v1457, 32
  %v1461 = vpop.permute.xlu0 %1460
  %v1463 = vmul.f32 %v1456, %v1461
  %1465 = vrot.lane.b32.xlu0 %v1463, 32
  %v1466 = vpop.permute.xlu0 %1465
  %v1468 = vadd.f32 %v1458, %v1466
  %v1469 = vtanh.pop %v1468
  %1471 = vrot.lane.b32.xlu0 %v1469, 32
  %v1472 = vpop.permute.xlu0 %1471
  %v1474 = vmul.f32 %v1456, %v1472
  %v1475 = vxor.u32 %v1450, 2147483648
  %v1476 = vmul.f32 %v1475, 1.442695
  %v1477 = vpow.pop %v1476
  %v1478 = vadd.f32 %v1477, 1.0
  %v1479 = vrcp.pop %v1478
  %v1480 = vmul.f32 1.0, %v1479
  %v1481 = vtanh.pop %v1450
  %v1482 = vmul.f32 %v1480, %v1361
  %1484 = vrot.lane.b32.xlu0 %v1481, 32
  %v1485 = vpop.permute.xlu0 %1484
  %v1487 = vmul.f32 %v1480, %v1485
  %1489 = vrot.lane.b32.xlu0 %v1487, 32
  %v1490 = vpop.permute.xlu0 %1489
  %v1492 = vadd.f32 %v1482, %v1490
  %v1493 = vtanh.pop %v1492
  %1495 = vrot.lane.b32.xlu0 %v1493, 32
  %v1496 = vpop.permute.xlu0 %1495
  %v1498 = vmul.f32 %v1480, %v1496
  %s1499 = sadd.s32 %s402, 6
  %v1500 = vstv %s1499
  %vm1501 = vcmp.lt.s32.totalorder %v1500, %v385
  %s1502 = sadd.s32 %s404, 1
  %v1503 = vstv %s1502
  %vm1504 = vcmp.lt.s32.totalorder %v1503, %v385
  %v1505 = vsel %vm1501, 1, 0
  %1506 = vset.pattern.permute.xlu0 0
  %1507 = vperm.xlu0 %1506, %v1505
  %v1508 = vpop.permute.xlu0 %1507
  %vm1509 = vcmp.eq.s32.totalorder %v1508, 1
  %v1510 = vsel %vm1509, %v1474, %v1353
  %v1511 = vsel %vm1509, %v1468, %v1354
  %v1512 = vsel %vm1504, 1, 0
  %1513 = vset.pattern.permute.xlu0 0
  %1514 = vperm.xlu0 %1513, %v1512
  %v1515 = vpop.permute.xlu0 %1514
  %vm1516 = vcmp.eq.s32.totalorder %v1515, 1
  %v1517 = vsel %vm1516, %v1498, %v1360
  %v1518 = vsel %vm1516, %v1492, %v1361
  %1520 = vrot.lane.b32.xlu0 %v1510, 64
  %v1521 = vpop.permute.xlu0 %1520
  %1524 = vrot.lane.b32.xlu0 %v1517, 96
  %v1525 = vpop.permute.xlu0 %1524
  %v1527 = vsel %vm413, %v1521, %v1525
  %v1529 = vsel %vm415, %v1527, 0
  %1531 = vmatprep.subr.mxu0 %v387
  %1532 = vmatpush1.msra.mxu0 %v386
  %1533 = vmatprep.subr.mxu0 %v389
  %1534 = vmatpush1.msra.mxu0 %v388
  %1535 = vmatprep.subr.mxu0 %v391
  %1536 = vmatpush1.msra.mxu0 %v390
  %1537 = vmatprep.subr.mxu0 %v393
  %1538 = vmatpush1.msra.mxu0 %v392
  %1539 = vmatprep.subr.mxu0 %v395
  %1540 = vmatpush1.msra.mxu0 %v394
  %1541 = vmatprep.subr.mxu0 %v397
  %1542 = vmatpush1.msra.mxu0 %v396
  %1543 = vmatprep.subr.mxu0 %v399
  %1544 = vmatpush1.msra.mxu0 %v398
  %1545 = vmatprep.subr.mxu0 %v401
  %1546 = vmatpush1.msra.mxu0 %v400
  %1547 = vmatprep.subr.mxu0 0.0
  %1548 = vmatpush1.msra.mxu0 0.0
  %1549 = vmatprep.subr.mxu0 0.0
  %1550 = vmatpush1.msra.mxu0 0.0
  %1551 = vmatprep.subr.mxu0 0.0
  %1552 = vmatpush1.msra.mxu0 0.0
  %1553 = vmatprep.subr.mxu0 0.0
  %1554 = vmatpush1.msra.mxu0 0.0
  %1555 = vmatprep.subr.mxu0 0.0
  %1556 = vmatpush1.msra.mxu0 0.0
  %1557 = vmatprep.subr.mxu0 0.0
  %1558 = vmatpush1.msra.mxu0 0.0
  %1559 = vmatprep.subr.mxu0 0.0
  %1560 = vmatpush1.msra.mxu0 0.0
  %1561 = vmatprep.subr.mxu0 0.0
  %1562 = vmatpush1.msra.mxu0 0.0
  %1563 = vmatprep.subr.mxu0 0.0
  %1564 = vmatpush1.msra.mxu0 0.0
  %1565 = vmatprep.subr.mxu0 0.0
  %1566 = vmatpush1.msra.mxu0 0.0
  %1567 = vmatprep.subr.mxu0 0.0
  %1568 = vmatpush1.msra.mxu0 0.0
  %1569 = vmatprep.subr.mxu0 0.0
  %1570 = vmatpush1.msra.mxu0 0.0
  %1571 = vmatprep.subr.mxu0 0.0
  %1572 = vmatpush1.msra.mxu0 0.0
  %1573 = vmatprep.subr.mxu0 0.0
  %1574 = vmatpush1.msra.mxu0 0.0
  %1575 = vmatprep.subr.mxu0 0.0
  %1576 = vmatpush1.msra.mxu0 0.0
  %1577 = vmatprep.subr.mxu0 0.0
  %1578 = vmatpush1.msra.mxu0 0.0
  %1579 = vmatprep.subr.mxu0 0.0
  %1580 = vmatpush1.msra.mxu0 0.0
  %1581 = vmatprep.subr.mxu0 0.0
  %1582 = vmatpush1.msra.mxu0 0.0
  %1583 = vmatprep.subr.mxu0 0.0
  %1584 = vmatpush1.msra.mxu0 0.0
  %1585 = vmatprep.subr.mxu0 0.0
  %1586 = vmatpush1.msra.mxu0 0.0
  %1587 = vmatprep.subr.mxu0 0.0
  %1588 = vmatpush1.msra.mxu0 0.0
  %1589 = vmatprep.subr.mxu0 0.0
  %1590 = vmatpush1.msra.mxu0 0.0
  %1591 = vmatprep.subr.mxu0 0.0
  %1592 = vmatpush1.msra.mxu0 0.0
  %1593 = vmatprep.subr.mxu0 0.0
  %1594 = vmatpush1.msra.mxu0 0.0
  %1595 = vmatprep.mubr.f32.mxu0 0.0
  %1596 = vmatmul.mubr.f32.gmra.mrb[0].mxu0 %v1529
  %v1597 = vpop.f32.mrb[0].mxu0
  %v1598 = vadd.f32 0.0, %v1597
  %v1599 = vpop.f32.mrb[0].mxu0
  %v1600 = vadd.f32 0.0, %v1599
  %1601 = vdwg.mxu0
  %s1602 = scalar_lea.vmem [#allocation2], 56
  %v1603 = vld [vmem:[%s1602] sm:$0xff]
  %v1604 = vadd.f32 %v1598, %v1603
  %v1605 = vld [vmem:[#allocation3] sm:$0xff]
  %v1606 = vadd.f32 %v1600, %v1605
  %v1607 = vxor.u32 %v1604, 2147483648
  %v1608 = vmul.f32 %v1607, 1.442695
  %v1609 = vpow.pop %v1608
  %v1610 = vadd.f32 %v1609, 1.0
  %v1611 = vrcp.pop %v1610
  %v1612 = vmul.f32 1.0, %v1611
  %v1613 = vtanh.pop %v1604
  %v1614 = vmul.f32 %v1612, %v1511
  %1616 = vrot.lane.b32.xlu0 %v1613, 32
  %v1617 = vpop.permute.xlu0 %1616
  %v1619 = vmul.f32 %v1612, %v1617
  %1621 = vrot.lane.b32.xlu0 %v1619, 32
  %v1622 = vpop.permute.xlu0 %1621
  %v1624 = vadd.f32 %v1614, %v1622
  %v1625 = vtanh.pop %v1624
  %1627 = vrot.lane.b32.xlu0 %v1625, 32
  %v1628 = vpop.permute.xlu0 %1627
  %v1630 = vmul.f32 %v1612, %v1628
  %v1631 = vxor.u32 %v1606, 2147483648
  %v1632 = vmul.f32 %v1631, 1.442695
  %v1633 = vpow.pop %v1632
  %v1634 = vadd.f32 %v1633, 1.0
  %v1635 = vrcp.pop %v1634
  %v1636 = vmul.f32 1.0, %v1635
  %v1637 = vtanh.pop %v1606
  %v1638 = vmul.f32 %v1636, %v1518
  %1640 = vrot.lane.b32.xlu0 %v1637, 32
  %v1641 = vpop.permute.xlu0 %1640
  %v1643 = vmul.f32 %v1636, %v1641
  %1645 = vrot.lane.b32.xlu0 %v1643, 32
  %v1646 = vpop.permute.xlu0 %1645
  %v1648 = vadd.f32 %v1638, %v1646
  %v1649 = vtanh.pop %v1648
  %1651 = vrot.lane.b32.xlu0 %v1649, 32
  %v1652 = vpop.permute.xlu0 %1651
  %v1654 = vmul.f32 %v1636, %v1652
  %s1655 = sadd.s32 %s402, 7
  %v1656 = vstv %s1655
  %vm1657 = vcmp.lt.s32.totalorder %v1656, %v385
  %v1658 = vstv %s404
  %vm1659 = vcmp.lt.s32.totalorder %v1658, %v385
  %v1660 = vsel %vm1657, 1, 0
  %1661 = vset.pattern.permute.xlu0 0
  %1662 = vperm.xlu0 %1661, %v1660
  %v1663 = vpop.permute.xlu0 %1662
  %vm1664 = vcmp.eq.s32.totalorder %v1663, 1
  %v1665 = vsel %vm1664, %v1630, %v1510
  %v1666 = vsel %vm1664, %v1624, %v1511
  %v1667 = vsel %vm1659, 1, 0
  %1668 = vset.pattern.permute.xlu0 0
  %1669 = vperm.xlu0 %1668, %v1667
  %v1670 = vpop.permute.xlu0 %1669
  %vm1671 = vcmp.eq.s32.totalorder %v1670, 1
  %v1672 = vsel %vm1671, %v1654, %v1517
  %v1673 = vsel %vm1671, %v1648, %v1518
  %1675 = vrot.lane.b32.xlu0 %v1665, 64
  %v1676 = vpop.permute.xlu0 %1675
  %1678 = vst.msk [vmem:[#allocation4] sm:$0xff] %vm413, %v1676
  %1680 = vrot.lane.b32.xlu0 %v1666, 96
  %v1681 = vpop.permute.xlu0 %1680
  %1683 = vst.msk [vmem:[#allocation5] sm:$0xff] %vm413, %v1681
  %1685 = vrot.lane.b32.xlu0 %v1672, 64
  %v1686 = vpop.permute.xlu0 %1685
  %1688 = vst.msk [vmem:[#allocation6] sm:$0xff] %vm413, %v1686
  %1690 = vrot.lane.b32.xlu0 %v1673, 96
  %v1691 = vpop.permute.xlu0 %1690
  %1693 = vst.msk [vmem:[#allocation7] sm:$0xff] %vm413, %v1691
  // Predicated region
  $region38: #{ser_rnn_encoder_forward.1} parent=0 // pred_check
    %p1694 = pneg %p51
  $region39: #{ser_rnn_encoder_forward.1} parent=0 // pred_check_branch
    %1696 = sbr.rel (%p1694) target = $region41
  $region40: #{ser_rnn_encoder_forward.1} parent=0 // pred_region
    %1697 = vrot.lane.b32.xlu0 %v1672, 96
    %v1698 = vpop.permute.xlu0 %1697
    %v1700 = vsel %vm413, %v1676, %v1698
    %1701 = vst.msk [vmem:[%s8] sm:$0xff] %vm415, %v1700
  $region41: #{ser_rnn_encoder_forward.1} parent=0 // pred_fallthru
    _
  // Predicated region
  $region42: #{ser_rnn_encoder_forward.1} parent=0 // pred_check
    _
  $region43: #{ser_rnn_encoder_forward.1} parent=0 // pred_check_branch
    %1703 = sbr.rel (0) target = $region45
  $region44: #{ser_rnn_encoder_forward.1} parent=0 // pred_region
    _
  $region45: #{ser_rnn_encoder_forward.1} parent=0 // pred_fallthru
    _
  // Predicated region
  $region46: #{ser_rnn_encoder_forward.1} parent=0 // pred_check
    _
  $region47: #{ser_rnn_encoder_forward.1} parent=0 // pred_check_branch
    %1705 = sbr.rel (0) target = $region49
  $region48: #{ser_rnn_encoder_forward.1} parent=0 // pred_region
    _
  $region49: #{ser_rnn_encoder_forward.1} parent=0 // pred_fallthru
    _

</llo_original>
